<compile_context>
chip_gen: v7x
topology: tpu7x:2x2x1
jax: 0.10.0
libtpu: 0.0.40
codegen_flags: <defaults>
</compile_context>

<pallas_src>
import math
from functools import partial

import jax
import jax.numpy as jnp
from jax import lax
from jax.experimental import pallas as pl
from jax.experimental.pallas import tpu as pltpu


_WEIGHT_SINGLE_BUFFER_OK = True   # cached: does this Pallas accept pl.Buffered(1)?


def _choose_tile(dim, target):
    """Largest multiple-of-8 divisor of `dim` that is <= target (else dim)."""
    if dim <= target:
        return dim
    t = (target // 8) * 8
    while t >= 8:
        if dim % t == 0:
            return t
        t -= 8
    return dim


def _vmem_limit_bytes(step_bytes):
    """Generation-aware VMEM request: 1.5x honest per-step footprint, capped
    at ~75% of physical VMEM (leaves headroom for compiler scratch/semaphores:
    ~48 MiB on v7x, ~96 MiB on v5e/v6e)."""
    try:
        phys = int(pltpu.get_tpu_info().vmem_capacity_bytes)
    except Exception:
        phys = 64 << 20                      # conservative (v7x-sized) fallback
    cap = (phys * 3) // 4
    want = (int(step_bytes) * 3) // 2
    return int(max(8 << 20, min(want, cap)))


# --------------------------------------------------------------------------
# Kernel 1: fused QKV projection -> head-major (B, H, T, d_k) q/k/v
# --------------------------------------------------------------------------
def _qkv_proj_kernel(x_ref, w_ref, b_ref, q_ref, k_ref, v_ref, *, num_heads, d_k):
    x = x_ref[0]                                             # (tt, C)
    C = num_heads * d_k
    # Single wide-N MXU matmul, f32 accumulation; w_ref is pre-transposed
    # [C, 3C] with the softmax scale folded into the Q columns.
    qkv = jnp.dot(x, w_ref[...], preferred_element_type=jnp.float32) + b_ref[0]
    qkv = qkv.astype(q_ref.dtype)                            # cast ONCE after bias add
    # Head-major relayout happens here, once, not in the attention inner loop.
    for h in range(num_heads):
        lo = h * d_k
        q_ref[0, h] = qkv[:, lo:lo + d_k]                    # already scaled
        k_ref[0, h] = qkv[:, C + lo:C + lo + d_k]
        v_ref[0, h] = qkv[:, 2 * C + lo:2 * C + lo + d_k]


# --------------------------------------------------------------------------
# Kernel 2: flash attention (online softmax) + fused output projection
# --------------------------------------------------------------------------
def _flash_mha_kernel(q_ref, k_ref, v_ref, wo_ref, bo_ref, o_ref,
                      m_ref, l_ref, acc_ref,
                      *, num_heads, d_k, matmul_dtype, exact_div):
    kv = pl.program_id(2)

    @pl.when(kv == 0)
    def _():
        m_ref[...] = jnp.full_like(m_ref, -jnp.inf)
        l_ref[...] = jnp.zeros_like(l_ref)
        acc_ref[...] = jnp.zeros_like(acc_ref)

    # Statically unrolled head loop: head h+1's QK^T (MXU) overlaps head h's
    # exp (EUP) and row max/sum (XLU) under the LLO scheduler.  Heads are
    # indexed on a leading axis (no lane slices in the hot loop).
    for h in range(num_heads):
        qh = q_ref[0, h]                                     # (tq, d_k), pre-scaled
        kh = k_ref[0, h]                                     # (tk, d_k)
        vh = v_ref[0, h]                                     # (tk, d_k)

        # scores = qh @ kh.T via dot_general (no explicit transpose)
        s = lax.dot_general(qh, kh, (((1,), (1,)), ((), ())),
                            preferred_element_type=jnp.float32)   # (tq, tk)

        m_prev = m_ref[h]                                    # (tq, 1)
        m_new = jnp.maximum(m_prev, jnp.max(s, axis=-1, keepdims=True))
        alpha = jnp.exp(m_prev - m_new)
        p = jnp.exp(s - m_new)
        l_ref[h] = alpha * l_ref[h] + jnp.sum(p, axis=-1, keepdims=True)
        if matmul_dtype is not None:
            p = p.astype(matmul_dtype)
        acc_ref[h] = alpha * acc_ref[h] + jnp.dot(
            p, vh, preferred_element_type=jnp.float32)
        m_ref[h] = m_new

    @pl.when(kv == pl.num_programs(2) - 1)
    def _():
        tq = q_ref.shape[2]
        C = num_heads * d_k
        # Output projection folded per head: out += ctx_h @ Wo_h rows.
        # No (tq, C) concat, Wo row slices are 8-aligned sublane slices.
        out = jnp.zeros((tq, C), jnp.float32)
        for h in range(num_heads):
            l_h = l_ref[h]
            inv = (1.0 / l_h) if exact_div else pl.reciprocal(l_h, approx=True)
            ctx_h = acc_ref[h] * inv                         # (tq, d_k) f32
            if matmul_dtype is not None:
                ctx_h = ctx_h.astype(matmul_dtype)
            out = out + jnp.dot(ctx_h, wo_ref[h * d_k:(h + 1) * d_k, :],
                                preferred_element_type=jnp.float32)
        o_ref[0] = (out + bo_ref[...]).astype(o_ref.dtype)


# --------------------------------------------------------------------------
# Wrapper
# --------------------------------------------------------------------------
def multi_headed_attention(x, params, num_heads, *, matmul_dtype=None,
                           q_tile=256, kv_tile=256, proj_tile=256,
                           exact_softmax_div=False):
    """Pallas MHA forward.

    params = (wq, bq, wk, bk, wv, bv, wo, bo), PyTorch nn.Linear convention
    (W is [out, in], y = x @ W.T + b).

    matmul_dtype=jnp.bfloat16 enables bf16 MXU operands — recommended on all
    TPU generations (v5e / v6e / v7x are bf16-native); accumulation, biases
    and softmax statistics remain f32.  exact_softmax_div=True replaces the
    approximate EUP reciprocal with an exact divide (training parity).
    """
    B, T, C = x.shape
    assert C % num_heads == 0, "hidden_size must be a multiple of num_heads"
    d_k = C // num_heads
    scale = 1.0 / math.sqrt(d_k)

    wq, bq, wk, bk, wv, bv, wo, bo = params

    # One-time wrapper-side packing: fused QKV weight pre-transposed to
    # [C, 3C]; softmax scale folded into the Q weight & bias.
    w_qkv = jnp.concatenate([wq * scale, wk, wv], axis=0).T          # (C, 3C)
    b_qkv = jnp.concatenate([bq * scale, bk, bv], axis=1)            # (1, 3C) f32
    wo_t = wo.T                                                      # (C, C)

    out_dtype = x.dtype
    if matmul_dtype is not None:
        x = x.astype(matmul_dtype)
        w_qkv = w_qkv.astype(matmul_dtype)
        wo_t = wo_t.astype(matmul_dtype)
    qkv_dtype = x.dtype                     # storage dtype of q/k/v intermediates

    tt = _choose_tile(T, proj_tile)
    tq = _choose_tile(T, q_tile)            # 256-512 keeps the MXU M dim efficient
    tk = _choose_tile(T, kv_tile)
    n_t, n_q, n_kv = T // tt, T // tq, T // tk

    x_isz = jnp.dtype(x.dtype).itemsize
    w_isz = jnp.dtype(w_qkv.dtype).itemsize
    qkv_isz = jnp.dtype(qkv_dtype).itemsize
    o_isz = jnp.dtype(out_dtype).itemsize

    proj_cost = pl.CostEstimate(
        flops=6 * B * T * C * C,
        transcendentals=0,
        bytes_accessed=(B * T * C * x_isz + 3 * C * C * w_isz + 3 * C * 4
                        + 3 * B * T * C * qkv_isz))
    flash_cost = pl.CostEstimate(
        flops=4 * B * T * T * C + 2 * B * T * C * C,
        transcendentals=B * num_heads * T * T,
        bytes_accessed=((1 + 2 * n_q) * B * T * C * qkv_isz
                        + C * C * w_isz + C * 4 + B * T * C * o_isz))

    def _run(single_buffer):
        wbuf = 1 if single_buffer else 2

        def wspec(shape, index_map):
            # Constant-index weight/bias blocks: single-buffer them when
            # supported (they are never re-fetched, double buffers waste VMEM).
            if single_buffer:
                return pl.BlockSpec(shape, index_map, pipeline_mode=pl.Buffered(1))
            return pl.BlockSpec(shape, index_map)

        # -------- kernel 1: fused QKV projection --------
        proj_step_bytes = (2 * tt * C * x_isz                 # x block (2 bufs)
                           + wbuf * 3 * C * C * w_isz         # fused W^T
                           + wbuf * 3 * C * 4                 # fused bias (f32)
                           + 2 * 3 * tt * C * qkv_isz         # q/k/v out blocks
                           + tt * 3 * C * 4                   # qkv f32 intermediate
                           + tt * 3 * C * qkv_isz)            # cast copy
        qkv_shape = jax.ShapeDtypeStruct((B, num_heads, T, d_k), qkv_dtype)
        q, k, v = pl.pallas_call(
            partial(_qkv_proj_kernel, num_heads=num_heads, d_k=d_k),
            out_shape=(qkv_shape, qkv_shape, qkv_shape),
            grid_spec=pltpu.PrefetchScalarGridSpec(
                num_scalar_prefetch=0,
                grid=(B, n_t),
                in_specs=[
                    pl.BlockSpec((1, tt, C), lambda b, t: (b, t, 0)),
                    wspec((C, 3 * C), lambda b, t: (0, 0)),
                    wspec((1, 3 * C), lambda b, t: (0, 0)),
                ],
                out_specs=(
                    pl.BlockSpec((1, num_heads, tt, d_k), lambda b, t: (b, 0, t, 0)),
                    pl.BlockSpec((1, num_heads, tt, d_k), lambda b, t: (b, 0, t, 0)),
                    pl.BlockSpec((1, num_heads, tt, d_k), lambda b, t: (b, 0, t, 0)),
                )),
            compiler_params=pltpu.CompilerParams(
                dimension_semantics=("parallel", "parallel"),
                vmem_limit_bytes=_vmem_limit_bytes(proj_step_bytes)),
            cost_estimate=proj_cost,
        )(x, w_qkv, b_qkv)

        # -------- kernel 2: flash attention + output projection --------
        flash_step_bytes = (2 * num_heads * tq * d_k * qkv_isz        # q block
                            + 2 * 2 * num_heads * tk * d_k * qkv_isz  # k, v blocks
                            + wbuf * C * C * w_isz + wbuf * C * 4     # Wo^T, bo
                            + 2 * tq * C * o_isz                      # out block
                            + 2 * num_heads * tq * 4                  # m, l scratch
                            + num_heads * tq * d_k * 4                # acc scratch
                            + 2 * tq * tk * 4                         # s and p (live)
                            + tq * C * 4)                             # epilogue acc
        out = pl.pallas_call(
            partial(_flash_mha_kernel, num_heads=num_heads, d_k=d_k,
                    matmul_dtype=matmul_dtype, exact_div=exact_softmax_div),
            out_shape=jax.ShapeDtypeStruct((B, T, C), out_dtype),
            grid_spec=pltpu.PrefetchScalarGridSpec(
                num_scalar_prefetch=0,
                grid=(B, n_q, n_kv),                 # kv axis last (reduction)
                in_specs=[
                    pl.BlockSpec((1, num_heads, tq, d_k),
                                 lambda b, qi, ki: (b, 0, qi, 0)),
                    pl.BlockSpec((1, num_heads, tk, d_k),
                                 lambda b, qi, ki: (b, 0, ki, 0)),
                    pl.BlockSpec((1, num_heads, tk, d_k),
                                 lambda b, qi, ki: (b, 0, ki, 0)),
                    wspec((C, C), lambda b, qi, ki: (0, 0)),
                    wspec((1, C), lambda b, qi, ki: (0, 0)),
                ],
                # Output block constant across kv -> accumulator residency,
                # lane-dense (C a multiple of 128 at realistic sizes).
                out_specs=pl.BlockSpec((1, tq, C), lambda b, qi, ki: (b, qi, 0)),
                scratch_shapes=[
                    pltpu.VMEM((num_heads, tq, 1), jnp.float32),    # m
                    pltpu.VMEM((num_heads, tq, 1), jnp.float32),    # l
                    pltpu.VMEM((num_heads, tq, d_k), jnp.float32),  # acc
                ]),
            compiler_params=pltpu.CompilerParams(
                dimension_semantics=("parallel", "parallel", "arbitrary"),
                vmem_limit_bytes=_vmem_limit_bytes(flash_step_bytes)),
            cost_estimate=flash_cost,
        )(q, k, v, wo_t, bo)
        return out

    global _WEIGHT_SINGLE_BUFFER_OK
    if _WEIGHT_SINGLE_BUFFER_OK:
        try:
            return _run(single_buffer=True)
        except Exception:
            # pl.Buffered(1) not supported by this Pallas build: fall back to
            # the default double-buffered weight blocks.
            _WEIGHT_SINGLE_BUFFER_OK = False
    return _run(single_buffer=False)


# --------------------------------------------------------------------------
# Pure-JAX reference mirroring the PyTorch forward exactly.
# --------------------------------------------------------------------------
def reference_mha(x, params, num_heads):
    wq, bq, wk, bk, wv, bv, wo, bo = params
    B, T, C = x.shape
    d_k = C // num_heads
    scale = 1.0 / math.sqrt(d_k)

    def lin(t, w, b):
        return t @ w.T + b[0]

    q = lin(x, wq, bq).reshape(B, T, num_heads, d_k).transpose(0, 2, 1, 3)
    k = lin(x, wk, bk).reshape(B, T, num_heads, d_k).transpose(0, 2, 1, 3)
    v = lin(x, wv, bv).reshape(B, T, num_heads, d_k).transpose(0, 2, 1, 3)
    dot = jnp.einsum('bhqd,bhkd->bhqk', q, k) * scale
    attn = jax.nn.softmax(dot, axis=-1)
    pre = jnp.einsum('bhqk,bhkd->bhqd', attn, v).transpose(0, 2, 1, 3)
    return lin(pre.reshape(B, T, C), wo, bo)


if __name__ == "__main__":
    B, T, C = 2, 8, 32
    num_heads = 4

    key = jax.random.PRNGKey(0)
    keys = jax.random.split(key, 9)

    bound = 1.0 / math.sqrt(C)
    wq = jax.random.uniform(keys[0], (C, C), jnp.float32, -bound, bound)
    bq = jax.random.uniform(keys[1], (1, C), jnp.float32, -bound, bound)
    wk = jax.random.uniform(keys[2], (C, C), jnp.float32, -bound, bound)
    bk = jax.random.uniform(keys[3], (1, C), jnp.float32, -bound, bound)
    wv = jax.random.uniform(keys[4], (C, C), jnp.float32, -bound, bound)
    bv = jax.random.uniform(keys[5], (1, C), jnp.float32, -bound, bound)
    wo = jax.random.uniform(keys[6], (C, C), jnp.float32, -bound, bound)
    bo = jax.random.uniform(keys[7], (1, C), jnp.float32, -bound, bound)
    params = (wq, bq, wk, bk, wv, bv, wo, bo)

    x = jax.random.normal(keys[8], (B, T, C), jnp.float32)

    ref = reference_mha(x, params, num_heads)

    # f32 MXU-operand path (tolerance covers the approx EUP reciprocal).
    out = jax.block_until_ready(multi_headed_attention(x, params, num_heads))
    assert out.shape == (B, T, C)
    assert jnp.allclose(out, ref, atol=2e-3, rtol=2e-3), "f32 path mismatch"

    # Exact-divide path (training parity of the softmax normalization).
    out_exact = jax.block_until_ready(
        multi_headed_attention(x, params, num_heads, exact_softmax_div=True))
    assert jnp.allclose(out_exact, ref, atol=1e-4, rtol=1e-4), "exact path mismatch"

    # bf16 MXU-operand fast path (recommended on v5e/v6e/v7x); f32 accum/softmax.
    out_bf16 = jax.block_until_ready(
        multi_headed_attention(x, params, num_heads, matmul_dtype=jnp.bfloat16))
    assert out_bf16.shape == (B, T, C)
    assert jnp.allclose(out_bf16, ref, atol=5e-2, rtol=5e-2), "bf16 path mismatch"

    print("KERNEL_OK")
</pallas_src>

<mosaic_0001>
module attributes {stable_mosaic.version = 11 : i64} {
  func.func @_qkv_proj_kernel(%arg0: i32, %arg1: i32, %arg2: memref<1x8x32xf32, #tpu.memory_space<vmem>>, %arg3: memref<32x96xf32, #tpu.memory_space<vmem>>, %arg4: memref<1x96xf32, #tpu.memory_space<vmem>>, %arg5: memref<1x4x8x8xf32, #tpu.memory_space<vmem>>, %arg6: memref<1x4x8x8xf32, #tpu.memory_space<vmem>>, %arg7: memref<1x4x8x8xf32, #tpu.memory_space<vmem>>) attributes {dimension_semantics = [#tpu.dimension_semantics<parallel>, #tpu.dimension_semantics<parallel>], iteration_bounds = array<i64: 2, 1>, scalar_prefetch = 0 : i64, scratch_operands = 0 : i64, tpu.core_type = #tpu.core_type<tc>, window_params = [{transform_indices = @transform_0, window_bounds = array<i64: 1, 8, 32>}, {pipeline_mode = #tpu.pipeline_mode<synchronous>, transform_indices = @transform_1, window_bounds = array<i64: 32, 96>}, {pipeline_mode = #tpu.pipeline_mode<synchronous>, transform_indices = @transform_2, window_bounds = array<i64: 1, 96>}, {transform_indices = @transform_3, window_bounds = array<i64: 1, 4, 8, 8>}, {transform_indices = @transform_4, window_bounds = array<i64: 1, 4, 8, 8>}, {transform_indices = @transform_5, window_bounds = array<i64: 1, 4, 8, 8>}]} {
    %c0 = arith.constant 0 : index
    %c0_0 = arith.constant 0 : index
    %c0_1 = arith.constant 0 : index
    %0 = vector.load %arg2[%c0, %c0_0, %c0_1] : memref<1x8x32xf32, #tpu.memory_space<vmem>>, vector<1x8x32xf32>
    %1 = vector.shape_cast %0 : vector<1x8x32xf32> to vector<8x32xf32>
    %c0_2 = arith.constant 0 : index
    %c0_3 = arith.constant 0 : index
    %2 = vector.load %arg3[%c0_2, %c0_3] : memref<32x96xf32, #tpu.memory_space<vmem>>, vector<32x96xf32>
    %cst = arith.constant dense<0.000000e+00> : vector<8x96xf32>
    %3 = tpu.matmul %1, %2, %cst {dimension_numbers = #tpu.dot_dimension_numbers<[1], [0], [0], [1], [0, 0, 1, 1], [], []>} : vector<8x32xf32>, vector<32x96xf32>, vector<8x96xf32> -> vector<8x96xf32>
    %c0_4 = arith.constant 0 : index
    %c0_5 = arith.constant 0 : index
    %4 = vector.load %arg4[%c0_4, %c0_5] : memref<1x96xf32, #tpu.memory_space<vmem>>, vector<1x96xf32>
    %5 = vector.shape_cast %4 : vector<1x96xf32> to vector<96xf32>
    %6 = vector.shape_cast %5 : vector<96xf32> to vector<1x96xf32>
    %7 = vector.broadcast %6 : vector<1x96xf32> to vector<8x96xf32>
    %8 = arith.addf %3, %7 : vector<8x96xf32>
    %9 = vector.extract_strided_slice %8 {offsets = [0, 0], sizes = [8, 8], strides = [1, 1]} : vector<8x96xf32> to vector<8x8xf32>
    %c0_6 = arith.constant 0 : index
    %c0_7 = arith.constant 0 : index
    %c0_8 = arith.constant 0 : index
    %c0_9 = arith.constant 0 : index
    %10 = vector.load %arg5[%c0_6, %c0_7, %c0_8, %c0_9] : memref<1x4x8x8xf32, #tpu.memory_space<vmem>>, vector<1x1x8x8xf32>
    %11 = vector.shape_cast %10 : vector<1x1x8x8xf32> to vector<8x8xf32>
    %12 = vector.shape_cast %9 : vector<8x8xf32> to vector<1x1x8x8xf32>
    tpu.vector_store %arg5[%c0_6, %c0_7, %c0_8, %c0_9], %12 {strides = array<i32>} : memref<1x4x8x8xf32, #tpu.memory_space<vmem>>, vector<1x1x8x8xf32>,
    %13 = vector.extract_strided_slice %8 {offsets = [0, 32], sizes = [8, 8], strides = [1, 1]} : vector<8x96xf32> to vector<8x8xf32>
    %c0_10 = arith.constant 0 : index
    %c0_11 = arith.constant 0 : index
    %c0_12 = arith.constant 0 : index
    %c0_13 = arith.constant 0 : index
    %14 = vector.load %arg6[%c0_10, %c0_11, %c0_12, %c0_13] : memref<1x4x8x8xf32, #tpu.memory_space<vmem>>, vector<1x1x8x8xf32>
    %15 = vector.shape_cast %14 : vector<1x1x8x8xf32> to vector<8x8xf32>
    %16 = vector.shape_cast %13 : vector<8x8xf32> to vector<1x1x8x8xf32>
    tpu.vector_store %arg6[%c0_10, %c0_11, %c0_12, %c0_13], %16 {strides = array<i32>} : memref<1x4x8x8xf32, #tpu.memory_space<vmem>>, vector<1x1x8x8xf32>,
    %17 = vector.extract_strided_slice %8 {offsets = [0, 64], sizes = [8, 8], strides = [1, 1]} : vector<8x96xf32> to vector<8x8xf32>
    %c0_14 = arith.constant 0 : index
    %c0_15 = arith.constant 0 : index
    %c0_16 = arith.constant 0 : index
    %c0_17 = arith.constant 0 : index
    %18 = vector.load %arg7[%c0_14, %c0_15, %c0_16, %c0_17] : memref<1x4x8x8xf32, #tpu.memory_space<vmem>>, vector<1x1x8x8xf32>
    %19 = vector.shape_cast %18 : vector<1x1x8x8xf32> to vector<8x8xf32>
    %20 = vector.shape_cast %17 : vector<8x8xf32> to vector<1x1x8x8xf32>
    tpu.vector_store %arg7[%c0_14, %c0_15, %c0_16, %c0_17], %20 {strides = array<i32>} : memref<1x4x8x8xf32, #tpu.memory_space<vmem>>, vector<1x1x8x8xf32>,
    %21 = vector.extract_strided_slice %8 {offsets = [0, 8], sizes = [8, 8], strides = [1, 1]} : vector<8x96xf32> to vector<8x8xf32>
    %c0_18 = arith.constant 0 : index
    %c1 = arith.constant 1 : index
    %c0_19 = arith.constant 0 : index
    %c0_20 = arith.constant 0 : index
    %22 = vector.load %arg5[%c0_18, %c1, %c0_19, %c0_20] : memref<1x4x8x8xf32, #tpu.memory_space<vmem>>, vector<1x1x8x8xf32>
    %23 = vector.shape_cast %22 : vector<1x1x8x8xf32> to vector<8x8xf32>
    %24 = vector.shape_cast %21 : vector<8x8xf32> to vector<1x1x8x8xf32>
    tpu.vector_store %arg5[%c0_18, %c1, %c0_19, %c0_20], %24 {strides = array<i32>} : memref<1x4x8x8xf32, #tpu.memory_space<vmem>>, vector<1x1x8x8xf32>,
    %25 = vector.extract_strided_slice %8 {offsets = [0, 40], sizes = [8, 8], strides = [1, 1]} : vector<8x96xf32> to vector<8x8xf32>
    %c0_21 = arith.constant 0 : index
    %c1_22 = arith.constant 1 : index
    %c0_23 = arith.constant 0 : index
    %c0_24 = arith.constant 0 : index
    %26 = vector.load %arg6[%c0_21, %c1_22, %c0_23, %c0_24] : memref<1x4x8x8xf32, #tpu.memory_space<vmem>>, vector<1x1x8x8xf32>
    %27 = vector.shape_cast %26 : vector<1x1x8x8xf32> to vector<8x8xf32>
    %28 = vector.shape_cast %25 : vector<8x8xf32> to vector<1x1x8x8xf32>
    tpu.vector_store %arg6[%c0_21, %c1_22, %c0_23, %c0_24], %28 {strides = array<i32>} : memref<1x4x8x8xf32, #tpu.memory_space<vmem>>, vector<1x1x8x8xf32>,
    %29 = vector.extract_strided_slice %8 {offsets = [0, 72], sizes = [8, 8], strides = [1, 1]} : vector<8x96xf32> to vector<8x8xf32>
    %c0_25 = arith.constant 0 : index
    %c1_26 = arith.constant 1 : index
    %c0_27 = arith.constant 0 : index
    %c0_28 = arith.constant 0 : index
    %30 = vector.load %arg7[%c0_25, %c1_26, %c0_27, %c0_28] : memref<1x4x8x8xf32, #tpu.memory_space<vmem>>, vector<1x1x8x8xf32>
    %31 = vector.shape_cast %30 : vector<1x1x8x8xf32> to vector<8x8xf32>
    %32 = vector.shape_cast %29 : vector<8x8xf32> to vector<1x1x8x8xf32>
    tpu.vector_store %arg7[%c0_25, %c1_26, %c0_27, %c0_28], %32 {strides = array<i32>} : memref<1x4x8x8xf32, #tpu.memory_space<vmem>>, vector<1x1x8x8xf32>,
    %33 = vector.extract_strided_slice %8 {offsets = [0, 16], sizes = [8, 8], strides = [1, 1]} : vector<8x96xf32> to vector<8x8xf32>
    %c0_29 = arith.constant 0 : index
    %c2 = arith.constant 2 : index
    %c0_30 = arith.constant 0 : index
    %c0_31 = arith.constant 0 : index
    %34 = vector.load %arg5[%c0_29, %c2, %c0_30, %c0_31] : memref<1x4x8x8xf32, #tpu.memory_space<vmem>>, vector<1x1x8x8xf32>
    %35 = vector.shape_cast %34 : vector<1x1x8x8xf32> to vector<8x8xf32>
    %36 = vector.shape_cast %33 : vector<8x8xf32> to vector<1x1x8x8xf32>
    tpu.vector_store %arg5[%c0_29, %c2, %c0_30, %c0_31], %36 {strides = array<i32>} : memref<1x4x8x8xf32, #tpu.memory_space<vmem>>, vector<1x1x8x8xf32>,
    %37 = vector.extract_strided_slice %8 {offsets = [0, 48], sizes = [8, 8], strides = [1, 1]} : vector<8x96xf32> to vector<8x8xf32>
    %c0_32 = arith.constant 0 : index
    %c2_33 = arith.constant 2 : index
    %c0_34 = arith.constant 0 : index
    %c0_35 = arith.constant 0 : index
    %38 = vector.load %arg6[%c0_32, %c2_33, %c0_34, %c0_35] : memref<1x4x8x8xf32, #tpu.memory_space<vmem>>, vector<1x1x8x8xf32>
    %39 = vector.shape_cast %38 : vector<1x1x8x8xf32> to vector<8x8xf32>
    %40 = vector.shape_cast %37 : vector<8x8xf32> to vector<1x1x8x8xf32>
    tpu.vector_store %arg6[%c0_32, %c2_33, %c0_34, %c0_35], %40 {strides = array<i32>} : memref<1x4x8x8xf32, #tpu.memory_space<vmem>>, vector<1x1x8x8xf32>,
    %41 = vector.extract_strided_slice %8 {offsets = [0, 80], sizes = [8, 8], strides = [1, 1]} : vector<8x96xf32> to vector<8x8xf32>
    %c0_36 = arith.constant 0 : index
    %c2_37 = arith.constant 2 : index
    %c0_38 = arith.constant 0 : index
    %c0_39 = arith.constant 0 : index
    %42 = vector.load %arg7[%c0_36, %c2_37, %c0_38, %c0_39] : memref<1x4x8x8xf32, #tpu.memory_space<vmem>>, vector<1x1x8x8xf32>
    %43 = vector.shape_cast %42 : vector<1x1x8x8xf32> to vector<8x8xf32>
    %44 = vector.shape_cast %41 : vector<8x8xf32> to vector<1x1x8x8xf32>
    tpu.vector_store %arg7[%c0_36, %c2_37, %c0_38, %c0_39], %44 {strides = array<i32>} : memref<1x4x8x8xf32, #tpu.memory_space<vmem>>, vector<1x1x8x8xf32>,
    %45 = vector.extract_strided_slice %8 {offsets = [0, 24], sizes = [8, 8], strides = [1, 1]} : vector<8x96xf32> to vector<8x8xf32>
    %c0_40 = arith.constant 0 : index
    %c3 = arith.constant 3 : index
    %c0_41 = arith.constant 0 : index
    %c0_42 = arith.constant 0 : index
    %46 = vector.load %arg5[%c0_40, %c3, %c0_41, %c0_42] : memref<1x4x8x8xf32, #tpu.memory_space<vmem>>, vector<1x1x8x8xf32>
    %47 = vector.shape_cast %46 : vector<1x1x8x8xf32> to vector<8x8xf32>
    %48 = vector.shape_cast %45 : vector<8x8xf32> to vector<1x1x8x8xf32>
    tpu.vector_store %arg5[%c0_40, %c3, %c0_41, %c0_42], %48 {strides = array<i32>} : memref<1x4x8x8xf32, #tpu.memory_space<vmem>>, vector<1x1x8x8xf32>,
    %49 = vector.extract_strided_slice %8 {offsets = [0, 56], sizes = [8, 8], strides = [1, 1]} : vector<8x96xf32> to vector<8x8xf32>
    %c0_43 = arith.constant 0 : index
    %c3_44 = arith.constant 3 : index
    %c0_45 = arith.constant 0 : index
    %c0_46 = arith.constant 0 : index
    %50 = vector.load %arg6[%c0_43, %c3_44, %c0_45, %c0_46] : memref<1x4x8x8xf32, #tpu.memory_space<vmem>>, vector<1x1x8x8xf32>
    %51 = vector.shape_cast %50 : vector<1x1x8x8xf32> to vector<8x8xf32>
    %52 = vector.shape_cast %49 : vector<8x8xf32> to vector<1x1x8x8xf32>
    tpu.vector_store %arg6[%c0_43, %c3_44, %c0_45, %c0_46], %52 {strides = array<i32>} : memref<1x4x8x8xf32, #tpu.memory_space<vmem>>, vector<1x1x8x8xf32>,
    %53 = vector.extract_strided_slice %8 {offsets = [0, 88], sizes = [8, 8], strides = [1, 1]} : vector<8x96xf32> to vector<8x8xf32>
    %c0_47 = arith.constant 0 : index
    %c3_48 = arith.constant 3 : index
    %c0_49 = arith.constant 0 : index
    %c0_50 = arith.constant 0 : index
    %54 = vector.load %arg7[%c0_47, %c3_48, %c0_49, %c0_50] : memref<1x4x8x8xf32, #tpu.memory_space<vmem>>, vector<1x1x8x8xf32>
    %55 = vector.shape_cast %54 : vector<1x1x8x8xf32> to vector<8x8xf32>
    %56 = vector.shape_cast %53 : vector<8x8xf32> to vector<1x1x8x8xf32>
    tpu.vector_store %arg7[%c0_47, %c3_48, %c0_49, %c0_50], %56 {strides = array<i32>} : memref<1x4x8x8xf32, #tpu.memory_space<vmem>>, vector<1x1x8x8xf32>,
    return
  }
  func.func @transform_0(%arg0: i32, %arg1: i32) -> (i32, i32, i32) {
    %c0_i32 = arith.constant 0 : i32
    %c0_i32_0 = arith.constant 0 : i32
    return %arg0, %arg1, %c0_i32 : i32, i32, i32
  }
  func.func @transform_1(%arg0: i32, %arg1: i32) -> (i32, i32) {
    %c0_i32 = arith.constant 0 : i32
    %c0_i32_0 = arith.constant 0 : i32
    %c0_i32_1 = arith.constant 0 : i32
    return %c0_i32, %c0_i32_0 : i32, i32
  }
  func.func @transform_2(%arg0: i32, %arg1: i32) -> (i32, i32) {
    %c0_i32 = arith.constant 0 : i32
    %c0_i32_0 = arith.constant 0 : i32
    %c0_i32_1 = arith.constant 0 : i32
    return %c0_i32, %c0_i32_0 : i32, i32
  }
  func.func @transform_3(%arg0: i32, %arg1: i32) -> (i32, i32, i32, i32) {
    %c0_i32 = arith.constant 0 : i32
    %c0_i32_0 = arith.constant 0 : i32
    %c0_i32_1 = arith.constant 0 : i32
    return %arg0, %c0_i32, %arg1, %c0_i32_0 : i32, i32, i32, i32
  }
  func.func @transform_4(%arg0: i32, %arg1: i32) -> (i32, i32, i32, i32) {
    %c0_i32 = arith.constant 0 : i32
    %c0_i32_0 = arith.constant 0 : i32
    %c0_i32_1 = arith.constant 0 : i32
    return %arg0, %c0_i32, %arg1, %c0_i32_0 : i32, i32, i32, i32
  }
  func.func @transform_5(%arg0: i32, %arg1: i32) -> (i32, i32, i32, i32) {
    %c0_i32 = arith.constant 0 : i32
    %c0_i32_0 = arith.constant 0 : i32
    %c0_i32_1 = arith.constant 0 : i32
    return %arg0, %c0_i32, %arg1, %c0_i32_0 : i32, i32, i32, i32
  }
}

module attributes {stable_mosaic.version = 11 : i64} {
  func.func @_qkv_proj_kernel(%arg0: i32, %arg1: i32, %arg2: memref<1x8x32xf32, #tpu.memory_space<vmem>>, %arg3: memref<32x96xf32, #tpu.memory_space<vmem>>, %arg4: memref<1x96xf32, #tpu.memory_space<vmem>>, %arg5: memref<1x4x8x8xf32, #tpu.memory_space<vmem>>, %arg6: memref<1x4x8x8xf32, #tpu.memory_space<vmem>>, %arg7: memref<1x4x8x8xf32, #tpu.memory_space<vmem>>) attributes {dimension_semantics = [#tpu.dimension_semantics<parallel>, #tpu.dimension_semantics<parallel>], iteration_bounds = array<i64: 2, 1>, scalar_prefetch = 0 : i64, scratch_operands = 0 : i64, tpu.core_type = #tpu.core_type<tc>, window_params = [{transform_indices = @transform_0, window_bounds = array<i64: 1, 8, 32>}, {pipeline_mode = #tpu.pipeline_mode<synchronous>, transform_indices = @transform_1, window_bounds = array<i64: 32, 96>}, {pipeline_mode = #tpu.pipeline_mode<synchronous>, transform_indices = @transform_2, window_bounds = array<i64: 1, 96>}, {transform_indices = @transform_3, window_bounds = array<i64: 1, 4, 8, 8>}, {transform_indices = @transform_4, window_bounds = array<i64: 1, 4, 8, 8>}, {transform_indices = @transform_5, window_bounds = array<i64: 1, 4, 8, 8>}]} {
    %c0 = arith.constant 0 : index
    %c0_0 = arith.constant 0 : index
    %c0_1 = arith.constant 0 : index
    %0 = vector.load %arg2[%c0, %c0_0, %c0_1] : memref<1x8x32xf32, #tpu.memory_space<vmem>>, vector<1x8x32xf32>
    %1 = vector.shape_cast %0 : vector<1x8x32xf32> to vector<8x32xf32>
    %c0_2 = arith.constant 0 : index
    %c0_3 = arith.constant 0 : index
    %2 = vector.load %arg3[%c0_2, %c0_3] : memref<32x96xf32, #tpu.memory_space<vmem>>, vector<32x96xf32>
    %cst = arith.constant dense<0.000000e+00> : vector<8x96xf32>
    %3 = tpu.matmul %1, %2, %cst {dimension_numbers = #tpu.dot_dimension_numbers<[1], [0], [0], [1], [0, 0, 1, 1], [], []>} : vector<8x32xf32>, vector<32x96xf32>, vector<8x96xf32> -> vector<8x96xf32>
    %c0_4 = arith.constant 0 : index
    %c0_5 = arith.constant 0 : index
    %4 = vector.load %arg4[%c0_4, %c0_5] : memref<1x96xf32, #tpu.memory_space<vmem>>, vector<1x96xf32>
    %5 = vector.shape_cast %4 : vector<1x96xf32> to vector<96xf32>
    %6 = vector.shape_cast %5 : vector<96xf32> to vector<1x96xf32>
    %7 = vector.broadcast %6 : vector<1x96xf32> to vector<8x96xf32>
    %8 = arith.addf %3, %7 : vector<8x96xf32>
    %9 = vector.extract_strided_slice %8 {offsets = [0, 0], sizes = [8, 8], strides = [1, 1]} : vector<8x96xf32> to vector<8x8xf32>
    %c0_6 = arith.constant 0 : index
    %c0_7 = arith.constant 0 : index
    %c0_8 = arith.constant 0 : index
    %c0_9 = arith.constant 0 : index
    %10 = vector.load %arg5[%c0_6, %c0_7, %c0_8, %c0_9] : memref<1x4x8x8xf32, #tpu.memory_space<vmem>>, vector<1x1x8x8xf32>
    %11 = vector.shape_cast %10 : vector<1x1x8x8xf32> to vector<8x8xf32>
    %12 = vector.shape_cast %9 : vector<8x8xf32> to vector<1x1x8x8xf32>
    tpu.vector_store %arg5[%c0_6, %c0_7, %c0_8, %c0_9], %12 {strides = array<i32>} : memref<1x4x8x8xf32, #tpu.memory_space<vmem>>, vector<1x1x8x8xf32>,
    %13 = vector.extract_strided_slice %8 {offsets = [0, 32], sizes = [8, 8], strides = [1, 1]} : vector<8x96xf32> to vector<8x8xf32>
    %c0_10 = arith.constant 0 : index
    %c0_11 = arith.constant 0 : index
    %c0_12 = arith.constant 0 : index
    %c0_13 = arith.constant 0 : index
    %14 = vector.load %arg6[%c0_10, %c0_11, %c0_12, %c0_13] : memref<1x4x8x8xf32, #tpu.memory_space<vmem>>, vector<1x1x8x8xf32>
    %15 = vector.shape_cast %14 : vector<1x1x8x8xf32> to vector<8x8xf32>
    %16 = vector.shape_cast %13 : vector<8x8xf32> to vector<1x1x8x8xf32>
    tpu.vector_store %arg6[%c0_10, %c0_11, %c0_12, %c0_13], %16 {strides = array<i32>} : memref<1x4x8x8xf32, #tpu.memory_space<vmem>>, vector<1x1x8x8xf32>,
    %17 = vector.extract_strided_slice %8 {offsets = [0, 64], sizes = [8, 8], strides = [1, 1]} : vector<8x96xf32> to vector<8x8xf32>
    %c0_14 = arith.constant 0 : index
    %c0_15 = arith.constant 0 : index
    %c0_16 = arith.constant 0 : index
    %c0_17 = arith.constant 0 : index
    %18 = vector.load %arg7[%c0_14, %c0_15, %c0_16, %c0_17] : memref<1x4x8x8xf32, #tpu.memory_space<vmem>>, vector<1x1x8x8xf32>
    %19 = vector.shape_cast %18 : vector<1x1x8x8xf32> to vector<8x8xf32>
    %20 = vector.shape_cast %17 : vector<8x8xf32> to vector<1x1x8x8xf32>
    tpu.vector_store %arg7[%c0_14, %c0_15, %c0_16, %c0_17], %20 {strides = array<i32>} : memref<1x4x8x8xf32, #tpu.memory_space<vmem>>, vector<1x1x8x8xf32>,
    %21 = vector.extract_strided_slice %8 {offsets = [0, 8], sizes = [8, 8], strides = [1, 1]} : vector<8x96xf32> to vector<8x8xf32>
    %c0_18 = arith.constant 0 : index
    %c1 = arith.constant 1 : index
    %c0_19 = arith.constant 0 : index
    %c0_20 = arith.constant 0 : index
    %22 = vector.load %arg5[%c0_18, %c1, %c0_19, %c0_20] : memref<1x4x8x8xf32, #tpu.memory_space<vmem>>, vector<1x1x8x8xf32>
    %23 = vector.shape_cast %22 : vector<1x1x8x8xf32> to vector<8x8xf32>
    %24 = vector.shape_cast %21 : vector<8x8xf32> to vector<1x1x8x8xf32>
    tpu.vector_store %arg5[%c0_18, %c1, %c0_19, %c0_20], %24 {strides = array<i32>} : memref<1x4x8x8xf32, #tpu.memory_space<vmem>>, vector<1x1x8x8xf32>,
    %25 = vector.extract_strided_slice %8 {offsets = [0, 40], sizes = [8, 8], strides = [1, 1]} : vector<8x96xf32> to vector<8x8xf32>
    %c0_21 = arith.constant 0 : index
    %c1_22 = arith.constant 1 : index
    %c0_23 = arith.constant 0 : index
    %c0_24 = arith.constant 0 : index
    %26 = vector.load %arg6[%c0_21, %c1_22, %c0_23, %c0_24] : memref<1x4x8x8xf32, #tpu.memory_space<vmem>>, vector<1x1x8x8xf32>
    %27 = vector.shape_cast %26 : vector<1x1x8x8xf32> to vector<8x8xf32>
    %28 = vector.shape_cast %25 : vector<8x8xf32> to vector<1x1x8x8xf32>
    tpu.vector_store %arg6[%c0_21, %c1_22, %c0_23, %c0_24], %28 {strides = array<i32>} : memref<1x4x8x8xf32, #tpu.memory_space<vmem>>, vector<1x1x8x8xf32>,
    %29 = vector.extract_strided_slice %8 {offsets = [0, 72], sizes = [8, 8], strides = [1, 1]} : vector<8x96xf32> to vector<8x8xf32>
    %c0_25 = arith.constant 0 : index
    %c1_26 = arith.constant 1 : index
    %c0_27 = arith.constant 0 : index
    %c0_28 = arith.constant 0 : index
    %30 = vector.load %arg7[%c0_25, %c1_26, %c0_27, %c0_28] : memref<1x4x8x8xf32, #tpu.memory_space<vmem>>, vector<1x1x8x8xf32>
    %31 = vector.shape_cast %30 : vector<1x1x8x8xf32> to vector<8x8xf32>
    %32 = vector.shape_cast %29 : vector<8x8xf32> to vector<1x1x8x8xf32>
    tpu.vector_store %arg7[%c0_25, %c1_26, %c0_27, %c0_28], %32 {strides = array<i32>} : memref<1x4x8x8xf32, #tpu.memory_space<vmem>>, vector<1x1x8x8xf32>,
    %33 = vector.extract_strided_slice %8 {offsets = [0, 16], sizes = [8, 8], strides = [1, 1]} : vector<8x96xf32> to vector<8x8xf32>
    %c0_29 = arith.constant 0 : index
    %c2 = arith.constant 2 : index
    %c0_30 = arith.constant 0 : index
    %c0_31 = arith.constant 0 : index
    %34 = vector.load %arg5[%c0_29, %c2, %c0_30, %c0_31] : memref<1x4x8x8xf32, #tpu.memory_space<vmem>>, vector<1x1x8x8xf32>
    %35 = vector.shape_cast %34 : vector<1x1x8x8xf32> to vector<8x8xf32>
    %36 = vector.shape_cast %33 : vector<8x8xf32> to vector<1x1x8x8xf32>
    tpu.vector_store %arg5[%c0_29, %c2, %c0_30, %c0_31], %36 {strides = array<i32>} : memref<1x4x8x8xf32, #tpu.memory_space<vmem>>, vector<1x1x8x8xf32>,
    %37 = vector.extract_strided_slice %8 {offsets = [0, 48], sizes = [8, 8], strides = [1, 1]} : vector<8x96xf32> to vector<8x8xf32>
    %c0_32 = arith.constant 0 : index
    %c2_33 = arith.constant 2 : index
    %c0_34 = arith.constant 0 : index
    %c0_35 = arith.constant 0 : index
    %38 = vector.load %arg6[%c0_32, %c2_33, %c0_34, %c0_35] : memref<1x4x8x8xf32, #tpu.memory_space<vmem>>, vector<1x1x8x8xf32>
    %39 = vector.shape_cast %38 : vector<1x1x8x8xf32> to vector<8x8xf32>
    %40 = vector.shape_cast %37 : vector<8x8xf32> to vector<1x1x8x8xf32>
    tpu.vector_store %arg6[%c0_32, %c2_33, %c0_34, %c0_35], %40 {strides = array<i32>} : memref<1x4x8x8xf32, #tpu.memory_space<vmem>>, vector<1x1x8x8xf32>,
    %41 = vector.extract_strided_slice %8 {offsets = [0, 80], sizes = [8, 8], strides = [1, 1]} : vector<8x96xf32> to vector<8x8xf32>
    %c0_36 = arith.constant 0 : index
    %c2_37 = arith.constant 2 : index
    %c0_38 = arith.constant 0 : index
    %c0_39 = arith.constant 0 : index
    %42 = vector.load %arg7[%c0_36, %c2_37, %c0_38, %c0_39] : memref<1x4x8x8xf32, #tpu.memory_space<vmem>>, vector<1x1x8x8xf32>
    %43 = vector.shape_cast %42 : vector<1x1x8x8xf32> to vector<8x8xf32>
    %44 = vector.shape_cast %41 : vector<8x8xf32> to vector<1x1x8x8xf32>
    tpu.vector_store %arg7[%c0_36, %c2_37, %c0_38, %c0_39], %44 {strides = array<i32>} : memref<1x4x8x8xf32, #tpu.memory_space<vmem>>, vector<1x1x8x8xf32>,
    %45 = vector.extract_strided_slice %8 {offsets = [0, 24], sizes = [8, 8], strides = [1, 1]} : vector<8x96xf32> to vector<8x8xf32>
    %c0_40 = arith.constant 0 : index
    %c3 = arith.constant 3 : index
    %c0_41 = arith.constant 0 : index
    %c0_42 = arith.constant 0 : index
    %46 = vector.load %arg5[%c0_40, %c3, %c0_41, %c0_42] : memref<1x4x8x8xf32, #tpu.memory_space<vmem>>, vector<1x1x8x8xf32>
    %47 = vector.shape_cast %46 : vector<1x1x8x8xf32> to vector<8x8xf32>
    %48 = vector.shape_cast %45 : vector<8x8xf32> to vector<1x1x8x8xf32>
    tpu.vector_store %arg5[%c0_40, %c3, %c0_41, %c0_42], %48 {strides = array<i32>} : memref<1x4x8x8xf32, #tpu.memory_space<vmem>>, vector<1x1x8x8xf32>,
    %49 = vector.extract_strided_slice %8 {offsets = [0, 56], sizes = [8, 8], strides = [1, 1]} : vector<8x96xf32> to vector<8x8xf32>
    %c0_43 = arith.constant 0 : index
    %c3_44 = arith.constant 3 : index
    %c0_45 = arith.constant 0 : index
    %c0_46 = arith.constant 0 : index
    %50 = vector.load %arg6[%c0_43, %c3_44, %c0_45, %c0_46] : memref<1x4x8x8xf32, #tpu.memory_space<vmem>>, vector<1x1x8x8xf32>
    %51 = vector.shape_cast %50 : vector<1x1x8x8xf32> to vector<8x8xf32>
    %52 = vector.shape_cast %49 : vector<8x8xf32> to vector<1x1x8x8xf32>
    tpu.vector_store %arg6[%c0_43, %c3_44, %c0_45, %c0_46], %52 {strides = array<i32>} : memref<1x4x8x8xf32, #tpu.memory_space<vmem>>, vector<1x1x8x8xf32>,
    %53 = vector.extract_strided_slice %8 {offsets = [0, 88], sizes = [8, 8], strides = [1, 1]} : vector<8x96xf32> to vector<8x8xf32>
    %c0_47 = arith.constant 0 : index
    %c3_48 = arith.constant 3 : index
    %c0_49 = arith.constant 0 : index
    %c0_50 = arith.constant 0 : index
    %54 = vector.load %arg7[%c0_47, %c3_48, %c0_49, %c0_50] : memref<1x4x8x8xf32, #tpu.memory_space<vmem>>, vector<1x1x8x8xf32>
    %55 = vector.shape_cast %54 : vector<1x1x8x8xf32> to vector<8x8xf32>
    %56 = vector.shape_cast %53 : vector<8x8xf32> to vector<1x1x8x8xf32>
    tpu.vector_store %arg7[%c0_47, %c3_48, %c0_49, %c0_50], %56 {strides = array<i32>} : memref<1x4x8x8xf32, #tpu.memory_space<vmem>>, vector<1x1x8x8xf32>,
    return
  }
  func.func @transform_0(%arg0: i32, %arg1: i32) -> (i32, i32, i32) {
    %c0_i32 = arith.constant 0 : i32
    %c0_i32_0 = arith.constant 0 : i32
    return %arg0, %arg1, %c0_i32 : i32, i32, i32
  }
  func.func @transform_1(%arg0: i32, %arg1: i32) -> (i32, i32) {
    %c0_i32 = arith.constant 0 : i32
    %c0_i32_0 = arith.constant 0 : i32
    %c0_i32_1 = arith.constant 0 : i32
    return %c0_i32, %c0_i32_0 : i32, i32
  }
  func.func @transform_2(%arg0: i32, %arg1: i32) -> (i32, i32) {
    %c0_i32 = arith.constant 0 : i32
    %c0_i32_0 = arith.constant 0 : i32
    %c0_i32_1 = arith.constant 0 : i32
    return %c0_i32, %c0_i32_0 : i32, i32
  }
  func.func @transform_3(%arg0: i32, %arg1: i32) -> (i32, i32, i32, i32) {
    %c0_i32 = arith.constant 0 : i32
    %c0_i32_0 = arith.constant 0 : i32
    %c0_i32_1 = arith.constant 0 : i32
    return %arg0, %c0_i32, %arg1, %c0_i32_0 : i32, i32, i32, i32
  }
  func.func @transform_4(%arg0: i32, %arg1: i32) -> (i32, i32, i32, i32) {
    %c0_i32 = arith.constant 0 : i32
    %c0_i32_0 = arith.constant 0 : i32
    %c0_i32_1 = arith.constant 0 : i32
    return %arg0, %c0_i32, %arg1, %c0_i32_0 : i32, i32, i32, i32
  }
  func.func @transform_5(%arg0: i32, %arg1: i32) -> (i32, i32, i32, i32) {
    %c0_i32 = arith.constant 0 : i32
    %c0_i32_0 = arith.constant 0 : i32
    %c0_i32_1 = arith.constant 0 : i32
    return %arg0, %c0_i32, %arg1, %c0_i32_0 : i32, i32, i32, i32
  }
}

</mosaic_0001>

<llo_original>
// kernel: tpu_custom_call.1
$region0: #{tpu_custom_call.1}
  #allocation0 [shape = 'u32[]', space=smem, size = 0x4, offset = 0x4, fixed_abs, tag = 'smem constant byte address 0x4 - core index']
  #allocation1 [shape = 'u32[144,128]{1,0:T(1,128)}', space=vmem, size = 0x12000, scoped, tag = 'internal scratch']
  %s0 = inlined_call_operand.hbm [shape: f32[2,8,32], index: 0, kind: input, shape index: {}]
  %s1 = inlined_call_operand.hbm [shape: f32[32,96], index: 1, kind: input, shape index: {}]
  %s2 = inlined_call_operand.vmem [shape: f32[1,96], index: 2, kind: input, shape index: {}]
  %s3 = inlined_call_operand.hbm [shape: f32[2,4,8,8], index: 3, kind: output, shape index: {0}]
  %s4 = inlined_call_operand.hbm [shape: f32[2,4,8,8], index: 4, kind: output, shape index: {1}]
  %s5 = inlined_call_operand.hbm [shape: f32[2,4,8,8], index: 5, kind: output, shape index: {2}]
  %6 = xla_tuple %s3, %s4, %s5
  %s7 = sld [smem:[#allocation0]]
  $region69: #{tpu_custom_call.1} parent=0
    _
  %s9 = ssub.s32 1, %s7
  %s10 = scalar_select 0, %s9, %s7
  $region1: #{tpu_custom_call.1} parent=0
    #allocation2 [shape = 'u8[8192]{0}', space=vmem, size = 0x2000, scoped, tag = 'input window, operand 0']
    #allocation3 [shape = 's32[2]{0}', space=sflag, size = 0x8, scoped, tag = 'scoped memory for tpu_custom_call.1']
    #allocation4 [shape = 's32[2]{0}', space=sflag, size = 0x8, scoped, tag = 'scoped memory for tpu_custom_call.1']
    #allocation5 [shape = 'u8[16384]{0}', space=vmem, size = 0x4000, scoped, tag = 'input window, operand 1, single buffered']
    #allocation6 [shape = 's32[1]{0}', space=sflag, size = 0x4, scoped, tag = 'scoped memory for tpu_custom_call.1']
    #allocation7 [shape = 'u8[32768]{0}', space=vmem, size = 0x8000, scoped, tag = 'output window, operand 0']
    #allocation8 [shape = 'u8[32768]{0}', space=vmem, size = 0x8000, scoped, tag = 'output window, operand 1']
    #allocation9 [shape = 's32[2]{0}', space=sflag, size = 0x8, scoped, tag = 'scoped memory for tpu_custom_call.1']
    #allocation10 [shape = 'u8[32768]{0}', space=vmem, size = 0x8000, scoped, tag = 'output window, operand 2']
    %11 = vsyncpa [#allocation3], 0
    %s12 = scalar_lea.sflag [#allocation3], 1
    %13 = vsyncpa %s12, 0
    %14 = vsyncpa [#allocation6], 0
    %15 = vsyncpa [#allocation4], 0
    %s16 = scalar_lea.sflag [#allocation4], 1
    %17 = vsyncpa %s16, 0
    %18 = vsyncpa [#allocation9], 0
    %s19 = scalar_lea.sflag [#allocation9], 1
    %20 = vsyncpa %s19, 0
    loop: start=0, step=1, limit=4
    $region2: #{tpu_custom_call.1} parent=1 // loop_pre_header
      _
    $region3: #{tpu_custom_call.1} parent=1 // loop_header
      %s22 = sphi 0, %s26
      %p23 = scmp.ge.s32.totalorder %s22, 4
      %s29 = sphi 0, %s41
      %s30 = sphi 0, %s37
      %s31 = sphi 0, %s29
      %s32 = sphi 0, %s30
      %s33 = sphi 0, %s31
      %s34 = sphi 0, %s32
      %s46 = sphi 0, %s48
      %s49 = sphi 0, %s46
      %s50 = sphi 0, %s49
      %s66 = sphi 0, %s50
      %s70 = sphi 0, %s70
      %s72 = sphi 0, %s70
      %s73 = sphi 0, %s72
      %s87 = sphi 0, %s73
      %s91 = sphi 0, %s91
      %s93 = sphi 0, %s91
      %s94 = sphi 0, %s93
      %s108 = sphi 0, %s94
      %s116 = sphi 0, %s118
      %s119 = sphi 0, %s116
      %s120 = sphi 0, %s119
      %s136 = sphi 0, %s120
      %s144 = sphi 0, %s146
      %s147 = sphi 0, %s144
      %s148 = sphi 0, %s147
      %s164 = sphi 0, %s148
      %s172 = sphi 0, %s174
      %s175 = sphi 0, %s172
      %s176 = sphi 0, %s175
      %s192 = sphi 0, %s176
    $region4: #{tpu_custom_call.1} parent=1 // loop_header_branch
      %25 = sbr.rel (%p23) target = $region8
    $region5: #{tpu_custom_call.1} parent=1 // loop_body
      %s27 = ssub.s32 %s22, 1
      %s28 = ssub.s32 %s22, 2
      %s35 = sadd.s32 1, %s30
      %p36 = scmp.ge.s32.totalorder %s35, 1
      %s37 = scalar_select %p36, 0, %s35
      %s38 = sadd.s32 1, %s29
      %s39 = scalar_select %p36, %s38, %s29
      %p40 = scmp.ge.s32.totalorder %s39, 2
      %s41 = scalar_select %p40, 0, %s39
      %s42 = ssub.s32 %s29, %s41
      %s43 = ssub.s32 %s30, %s37
      %s44 = sor.u32 %s42, %s43
      %p45 = scmp.eq.s32.totalorder %s44, 0
      %s47 = sadd.s32 %s46, 1
      %s48 = scalar_select %p45, %s46, %s47
      %p51 = pneg %p45
      %p52 = scmp.eq.s32.totalorder %s22, 1
      %p53 = por %p51, %p52
      %p54 = scmp.ne.s32.totalorder %s46, %s49
      %p55 = scmp.eq.s32.totalorder %s22, 0
      %p56 = por %p54, %p55
      %p57 = scmp.ne.s32.totalorder %s46, %s49
      %p58 = scmp.eq.s32.totalorder %s27, 1
      %p59 = por %p57, %p58
      %p60 = scmp.ne.s32.totalorder %s49, %s50
      %p61 = scmp.eq.s32.totalorder %s27, 0
      %p62 = por %p60, %p61
      %p63 = scmp.ne.s32.totalorder %s49, %s50
      %p64 = scmp.eq.s32.totalorder %s28, 1
      %p65 = por %p63, %p64
      %p67 = scmp.ne.s32.totalorder %s50, %s66
      %p68 = scmp.eq.s32.totalorder %s28, 0
      %p69 = por %p67, %p68
      %s71 = sadd.s32 %s70, 1
      %p74 = scmp.eq.s32.totalorder %s22, 1
      %p75 = scmp.ne.s32.totalorder %s70, %s72
      %p76 = scmp.eq.s32.totalorder %s22, 0
      %p77 = por %p75, %p76
      %p78 = scmp.ne.s32.totalorder %s70, %s72
      %p79 = scmp.eq.s32.totalorder %s27, 1
      %p80 = por %p78, %p79
      %p81 = scmp.ne.s32.totalorder %s72, %s73
      %p82 = scmp.eq.s32.totalorder %s27, 0
      %p83 = por %p81, %p82
      %p84 = scmp.ne.s32.totalorder %s72, %s73
      %p85 = scmp.eq.s32.totalorder %s28, 1
      %p86 = por %p84, %p85
      %p88 = scmp.ne.s32.totalorder %s73, %s87
      %p89 = scmp.eq.s32.totalorder %s28, 0
      %p90 = por %p88, %p89
      %s92 = sadd.s32 %s91, 1
      %p95 = scmp.eq.s32.totalorder %s22, 1
      %p96 = scmp.ne.s32.totalorder %s91, %s93
      %p97 = scmp.eq.s32.totalorder %s22, 0
      %p98 = por %p96, %p97
      %p99 = scmp.ne.s32.totalorder %s91, %s93
      %p100 = scmp.eq.s32.totalorder %s27, 1
      %p101 = por %p99, %p100
      %p102 = scmp.ne.s32.totalorder %s93, %s94
      %p103 = scmp.eq.s32.totalorder %s27, 0
      %p104 = por %p102, %p103
      %p105 = scmp.ne.s32.totalorder %s93, %s94
      %p106 = scmp.eq.s32.totalorder %s28, 1
      %p107 = por %p105, %p106
      %p109 = scmp.ne.s32.totalorder %s94, %s108
      %p110 = scmp.eq.s32.totalorder %s28, 0
      %p111 = por %p109, %p110
      %s112 = ssub.s32 %s29, %s41
      %s113 = ssub.s32 %s30, %s37
      %s114 = sor.u32 %s112, %s113
      %p115 = scmp.eq.s32.totalorder %s114, 0
      %s117 = sadd.s32 %s116, 1
      %s118 = scalar_select %p115, %s116, %s117
      %p121 = pneg %p115
      %p122 = scmp.eq.s32.totalorder %s22, 1
      %p123 = por %p121, %p122
      %p124 = scmp.ne.s32.totalorder %s116, %s119
      %p125 = scmp.eq.s32.totalorder %s22, 0
      %p126 = por %p124, %p125
      %p127 = scmp.ne.s32.totalorder %s116, %s119
      %p128 = scmp.eq.s32.totalorder %s27, 1
      %p129 = por %p127, %p128
      %p130 = scmp.ne.s32.totalorder %s119, %s120
      %p131 = scmp.eq.s32.totalorder %s27, 0
      %p132 = por %p130, %p131
      %p133 = scmp.ne.s32.totalorder %s119, %s120
      %p134 = scmp.eq.s32.totalorder %s28, 1
      %p135 = por %p133, %p134
      %p137 = scmp.ne.s32.totalorder %s120, %s136
      %p138 = scmp.eq.s32.totalorder %s28, 0
      %p139 = por %p137, %p138
      %s140 = ssub.s32 %s29, %s41
      %s141 = ssub.s32 %s30, %s37
      %s142 = sor.u32 %s140, %s141
      %p143 = scmp.eq.s32.totalorder %s142, 0
      %s145 = sadd.s32 %s144, 1
      %s146 = scalar_select %p143, %s144, %s145
      %p149 = pneg %p143
      %p150 = scmp.eq.s32.totalorder %s22, 1
      %p151 = por %p149, %p150
      %p152 = scmp.ne.s32.totalorder %s144, %s147
      %p153 = scmp.eq.s32.totalorder %s22, 0
      %p154 = por %p152, %p153
      %p155 = scmp.ne.s32.totalorder %s144, %s147
      %p156 = scmp.eq.s32.totalorder %s27, 1
      %p157 = por %p155, %p156
      %p158 = scmp.ne.s32.totalorder %s147, %s148
      %p159 = scmp.eq.s32.totalorder %s27, 0
      %p160 = por %p158, %p159
      %p161 = scmp.ne.s32.totalorder %s147, %s148
      %p162 = scmp.eq.s32.totalorder %s28, 1
      %p163 = por %p161, %p162
      %p165 = scmp.ne.s32.totalorder %s148, %s164
      %p166 = scmp.eq.s32.totalorder %s28, 0
      %p167 = por %p165, %p166
      %s168 = ssub.s32 %s29, %s41
      %s169 = ssub.s32 %s30, %s37
      %s170 = sor.u32 %s168, %s169
      %p171 = scmp.eq.s32.totalorder %s170, 0
      %s173 = sadd.s32 %s172, 1
      %s174 = scalar_select %p171, %s172, %s173
      %p177 = pneg %p171
      %p178 = scmp.eq.s32.totalorder %s22, 1
      %p179 = por %p177, %p178
      %p180 = scmp.ne.s32.totalorder %s172, %s175
      %p181 = scmp.eq.s32.totalorder %s22, 0
      %p182 = por %p180, %p181
      %p183 = scmp.ne.s32.totalorder %s172, %s175
      %p184 = scmp.eq.s32.totalorder %s27, 1
      %p185 = por %p183, %p184
      %p186 = scmp.ne.s32.totalorder %s175, %s176
      %p187 = scmp.eq.s32.totalorder %s27, 0
      %p188 = por %p186, %p187
      %p189 = scmp.ne.s32.totalorder %s175, %s176
      %p190 = scmp.eq.s32.totalorder %s28, 1
      %p191 = por %p189, %p190
      %p193 = scmp.ne.s32.totalorder %s176, %s192
      %p194 = scmp.eq.s32.totalorder %s28, 0
      %p195 = por %p193, %p194
      %p196 = scmp.le.s32.totalorder 1, %s22
      %p197 = scmp.lt.s32.totalorder %s22, 3
      %p198 = pnand %p196, %p197
      %p199 = pneg %p198
      // Predicated region
      $region9: #{tpu_custom_call.1} parent=5 // pred_check
        _
      $region10: #{tpu_custom_call.1} parent=5 // pred_check_branch
        %201 = sbr.rel (%p198) target = $region12
      $region11: #{tpu_custom_call.1} parent=5 // pred_region
        %s202 = ssub.s32 %s22, 1
        // Predicated region
        $region13: #{tpu_custom_call.1} parent=11 // pred_check
          %p203 = pneg %p83
        $region14: #{tpu_custom_call.1} parent=11 // pred_check_branch
          %205 = sbr.rel (%p203) target = $region16
        $region15: #{tpu_custom_call.1} parent=11 // pred_region
          %s207 = ssub.s32 512, 512
          %208 = vsyncadd [#allocation6], %s207
          %s209 = sshll.u32 [#allocation5], 4
          %s210 = int_to_ptr.vmem [resolvable:$true] %s209
          %215 = dma.hbm_to_vmem [thread:$0]  %s1, 512, %s210, [#allocation6], 128, 128, 8
        $region16: #{tpu_custom_call.1} parent=11 // pred_fallthru
          _
        // Predicated region
        $region17: #{tpu_custom_call.1} parent=11 // pred_check
          %p216 = pneg %p104
        $region18: #{tpu_custom_call.1} parent=11 // pred_check_branch
          %218 = sbr.rel (%p216) target = $region20
        $region19: #{tpu_custom_call.1} parent=11 // pred_region
          _
        $region20: #{tpu_custom_call.1} parent=11 // pred_fallthru
          _
      $region12: #{tpu_custom_call.1} parent=5 // pred_fallthru
        _
      %p219 = scmp.lt.s32.totalorder %s22, 2
      // Predicated region
      $region21: #{tpu_custom_call.1} parent=5 // pred_check
        %p220 = pneg %p219
      $region22: #{tpu_custom_call.1} parent=5 // pred_check_branch
        %222 = sbr.rel (%p220) target = $region24
      $region23: #{tpu_custom_call.1} parent=5 // pred_region
        // Predicated region
        $region25: #{tpu_custom_call.1} parent=23 // pred_check
          %p223 = pneg %p56
        $region26: #{tpu_custom_call.1} parent=23 // pred_check_branch
          %225 = sbr.rel (%p223) target = $region28
        $region27: #{tpu_custom_call.1} parent=23 // pred_region
          %s226 = sand.u32 %s46, 1
          %s227 = scalar_lea.sflag [#allocation3], %s226
          %s228 = sand.u32 %s46, 1
          %s229 = smul.addr %s228, 8
          %s230 = scalar_lea.vmem [#allocation2], %s229
          %s232 = ssub.s32 128, 128
          %233 = vsyncadd %s227, %s232
          %s234 = sadd.s32 %s30, %s29
          %s235 = smul.addr %s234, 128
          %s236 = scalar_lea.hbm %s0, %s235
          %s238 = sshll.u32 %s230, 4
          %s239 = int_to_ptr.vmem [resolvable:$true] %s238
          %241 = dma.hbm_to_vmem [thread:$0]  %s236, 128, %s239, %s227
        $region28: #{tpu_custom_call.1} parent=23 // pred_fallthru
          _
      $region24: #{tpu_custom_call.1} parent=5 // pred_fallthru
        _
      %p242 = scmp.le.s32.totalorder 1, %s22
      %p243 = scmp.lt.s32.totalorder %s22, 3
      %p244 = pnand %p242, %p243
      %p245 = pneg %p244
      // Predicated region
      $region29: #{tpu_custom_call.1} parent=5 // pred_check
        _
      $region30: #{tpu_custom_call.1} parent=5 // pred_check_branch
        %247 = sbr.rel (%p244) target = $region32
      $region31: #{tpu_custom_call.1} parent=5 // pred_region
        %s248 = ssub.s32 %s22, 1
        %s249 = sand.u32 %s49, 1
        %s250 = scalar_lea.sflag [#allocation3], %s249
        %s251 = sand.u32 %s49, 1
        %s252 = smul.addr %s251, 8
        %s253 = scalar_lea.vmem [#allocation2], %s252
        // Predicated region
        $region33: #{tpu_custom_call.1} parent=31 // pred_check
          %p254 = pneg %p62
        $region34: #{tpu_custom_call.1} parent=31 // pred_check_branch
          %256 = sbr.rel (%p254) target = $region36
        $region35: #{tpu_custom_call.1} parent=31 // pred_region
          %257 = dma.done %s250, 128
        $region36: #{tpu_custom_call.1} parent=31 // pred_fallthru
          _
        // Predicated region
        $region37: #{tpu_custom_call.1} parent=31 // pred_check
          %p258 = pneg %p83
        $region38: #{tpu_custom_call.1} parent=31 // pred_check_branch
          %260 = sbr.rel (%p258) target = $region40
        $region39: #{tpu_custom_call.1} parent=31 // pred_region
          %261 = dma.done [#allocation6], 512
        $region40: #{tpu_custom_call.1} parent=31 // pred_fallthru
          _
        %s262 = sand.u32 %s49, 1
        %s263 = scalar_lea.sflag [#allocation3], %s262
        %s264 = sand.u32 %s49, 1
        %s265 = smul.addr %s264, 8
        %s266 = scalar_lea.vmem [#allocation2], %s265
        %p267 = pneg %p62
        %p268 = pneg %p59
        %p269 = pneg %p83
        %p270 = pneg %p80
        %p271 = pneg %p104
        %p272 = pneg %p101
        %p273 = pneg %p132
        %p274 = pneg %p129
        %s275 = sand.u32 %s119, 1
        %s276 = scalar_lea.sflag [#allocation4], %s275
        %s277 = sand.u32 %s119, 1
        %s278 = smul.addr %s277, 32
        %s279 = scalar_lea.vmem [#allocation7], %s278
        %p280 = pneg %p160
        %p281 = pneg %p157
        %s282 = sand.u32 %s27, 1
        %s283 = scalar_lea.sflag [#allocation9], %s282
        %s284 = sand.u32 %s147, 1
        %s285 = smul.addr %s284, 32
        %s286 = scalar_lea.vmem [#allocation8], %s285
        %p287 = pneg %p188
        %p288 = pneg %p185
        %s289 = sand.u32 %s27, 1
        %s290 = scalar_lea.sflag [#allocation9], %s289
        %s291 = sand.u32 %s175, 1
        %s292 = smul.addr %s291, 32
        %s293 = scalar_lea.vmem [#allocation10], %s292
        %v294 = vld [vmem:[%s253] sm:$0xff]
        %v295 = vld [vmem:[#allocation5] sm:$0xff]
        %v296 = vld [vmem:[#allocation5 + $0x8] sm:$0xff]
        %v297 = vld [vmem:[#allocation5 + $0x10] sm:$0xff]
        %v298 = vld [vmem:[#allocation5 + $0x18] sm:$0xff]
        %v299 = vld [vmem:[%s2] sm:$0x1]
        %v301 = vlaneseq
        %v302 = vshrl.u32 %v301, 7
        %v303 = vsub.s32 0, %v302
        %v304 = vrot.slane %v299, %v303
        %vm306 = vcmask 261120
        %v308 = vsel %vm306, %v294, 0
        %310 = vmatprep.subr.mxu0 0.0
        %311 = vmatpush1.msra.mxu0 %v295
        %312 = vmatprep.subr.mxu0 0.0
        %313 = vmatpush1.msra.mxu0 %v296
        %314 = vmatprep.subr.mxu0 0.0
        %315 = vmatpush1.msra.mxu0 %v297
        %316 = vmatprep.subr.mxu0 0.0
        %317 = vmatpush1.msra.mxu0 %v298
        %318 = vmatprep.subr.mxu0 0.0
        %319 = vmatpush1.msra.mxu0 0.0
        %320 = vmatprep.subr.mxu0 0.0
        %321 = vmatpush1.msra.mxu0 0.0
        %322 = vmatprep.subr.mxu0 0.0
        %323 = vmatpush1.msra.mxu0 0.0
        %324 = vmatprep.subr.mxu0 0.0
        %325 = vmatpush1.msra.mxu0 0.0
        %326 = vmatprep.subr.mxu0 0.0
        %327 = vmatpush1.msra.mxu0 0.0
        %328 = vmatprep.subr.mxu0 0.0
        %329 = vmatpush1.msra.mxu0 0.0
        %330 = vmatprep.subr.mxu0 0.0
        %331 = vmatpush1.msra.mxu0 0.0
        %332 = vmatprep.subr.mxu0 0.0
        %333 = vmatpush1.msra.mxu0 0.0
        %334 = vmatprep.subr.mxu0 0.0
        %335 = vmatpush1.msra.mxu0 0.0
        %336 = vmatprep.subr.mxu0 0.0
        %337 = vmatpush1.msra.mxu0 0.0
        %338 = vmatprep.subr.mxu0 0.0
        %339 = vmatpush1.msra.mxu0 0.0
        %340 = vmatprep.subr.mxu0 0.0
        %341 = vmatpush1.msra.mxu0 0.0
        %342 = vmatprep.subr.mxu0 0.0
        %343 = vmatpush1.msra.mxu0 0.0
        %344 = vmatprep.subr.mxu0 0.0
        %345 = vmatpush1.msra.mxu0 0.0
        %346 = vmatprep.subr.mxu0 0.0
        %347 = vmatpush1.msra.mxu0 0.0
        %348 = vmatprep.subr.mxu0 0.0
        %349 = vmatpush1.msra.mxu0 0.0
        %350 = vmatprep.subr.mxu0 0.0
        %351 = vmatpush1.msra.mxu0 0.0
        %352 = vmatprep.subr.mxu0 0.0
        %353 = vmatpush1.msra.mxu0 0.0
        %354 = vmatprep.subr.mxu0 0.0
        %355 = vmatpush1.msra.mxu0 0.0
        %356 = vmatprep.subr.mxu0 0.0
        %357 = vmatpush1.msra.mxu0 0.0
        %358 = vmatprep.subr.mxu0 0.0
        %359 = vmatpush1.msra.mxu0 0.0
        %360 = vmatprep.subr.mxu0 0.0
        %361 = vmatpush1.msra.mxu0 0.0
        %362 = vmatprep.subr.mxu0 0.0
        %363 = vmatpush1.msra.mxu0 0.0
        %364 = vmatprep.subr.mxu0 0.0
        %365 = vmatpush1.msra.mxu0 0.0
        %366 = vmatprep.subr.mxu0 0.0
        %367 = vmatpush1.msra.mxu0 0.0
        %368 = vmatprep.subr.mxu0 0.0
        %369 = vmatpush1.msra.mxu0 0.0
        %370 = vmatprep.subr.mxu0 0.0
        %371 = vmatpush1.msra.mxu0 0.0
        %372 = vmatprep.subr.mxu0 0.0
        %373 = vmatpush1.msra.mxu0 0.0
        %374 = vmatprep.mubr.f32.mxu0 0.0
        %375 = vmatmul.mubr.f32.gmra.mrb[0].mxu0 %v308
        %v376 = vpop.f32.mrb[0].mxu0
        %v377 = vadd.f32 %v304, %v376
        %v378 = vpop.f32.mrb[0].mxu0
        %379 = vdwg.mxu0
        %vm380 = vcmask 64512
        %381 = vst.msk [vmem:[%s279] sm:$0xff] %vm380, %v377
        %383 = vrot.lane.b32.xlu0 %v377, 96
        %v384 = vpop.permute.xlu0 %383
        %386 = vst.msk [vmem:[%s286] sm:$0xff] %vm380, %v384
        %387 = vrot.lane.b32.xlu0 %v377, 64
        %v388 = vpop.permute.xlu0 %387
        %390 = vst.msk [vmem:[%s293] sm:$0xff] %vm380, %v388
        %391 = vrot.lane.b32.xlu0 %v377, 120
        %v392 = vpop.permute.xlu0 %391
        %s394 = scalar_lea.vmem %s279, 8 [#allocation7]
        %395 = vst.msk [vmem:[%s394] sm:$0xff] %vm380, %v392
        %396 = vrot.lane.b32.xlu0 %v377, 88
        %v397 = vpop.permute.xlu0 %396
        %s399 = scalar_lea.vmem %s286, 8 [#allocation8]
        %400 = vst.msk [vmem:[%s399] sm:$0xff] %vm380, %v397
        %401 = vrot.lane.b32.xlu0 %v377, 56
        %v402 = vpop.permute.xlu0 %401
        %s404 = scalar_lea.vmem %s293, 8 [#allocation10]
        %405 = vst.msk [vmem:[%s404] sm:$0xff] %vm380, %v402
        %406 = vrot.lane.b32.xlu0 %v377, 112
        %v407 = vpop.permute.xlu0 %406
        %s409 = scalar_lea.vmem %s279, 16 [#allocation7]
        %410 = vst.msk [vmem:[%s409] sm:$0xff] %vm380, %v407
        %411 = vrot.lane.b32.xlu0 %v377, 80
        %v412 = vpop.permute.xlu0 %411
        %s414 = scalar_lea.vmem %s286, 16 [#allocation8]
        %415 = vst.msk [vmem:[%s414] sm:$0xff] %vm380, %v412
        %416 = vrot.lane.b32.xlu0 %v377, 48
        %v417 = vpop.permute.xlu0 %416
        %s419 = scalar_lea.vmem %s293, 16 [#allocation10]
        %420 = vst.msk [vmem:[%s419] sm:$0xff] %vm380, %v417
        %421 = vrot.lane.b32.xlu0 %v377, 104
        %v422 = vpop.permute.xlu0 %421
        %s424 = scalar_lea.vmem %s279, 24 [#allocation7]
        %425 = vst.msk [vmem:[%s424] sm:$0xff] %vm380, %v422
        %426 = vrot.lane.b32.xlu0 %v377, 72
        %v427 = vpop.permute.xlu0 %426
        %s429 = scalar_lea.vmem %s286, 24 [#allocation8]
        %430 = vst.msk [vmem:[%s429] sm:$0xff] %vm380, %v427
        %431 = vrot.lane.b32.xlu0 %v377, 40
        %v432 = vpop.permute.xlu0 %431
        %s434 = scalar_lea.vmem %s293, 24 [#allocation10]
        %435 = vst.msk [vmem:[%s434] sm:$0xff] %vm380, %v432
        %s436 = sand.u32 %s119, 1
        %s437 = scalar_lea.sflag [#allocation4], %s436
        %s438 = sand.u32 %s119, 1
        %s439 = smul.addr %s438, 32
        %s440 = scalar_lea.vmem [#allocation7], %s439
        %s441 = sand.u32 %s27, 1
        %s442 = scalar_lea.sflag [#allocation9], %s441
        %s443 = sand.u32 %s147, 1
        %s444 = smul.addr %s443, 32
        %s445 = scalar_lea.vmem [#allocation8], %s444
        %s446 = sand.u32 %s27, 1
        %s447 = scalar_lea.sflag [#allocation9], %s446
        %s448 = sand.u32 %s175, 1
        %s449 = smul.addr %s448, 32
        %s450 = scalar_lea.vmem [#allocation10], %s449
        // Predicated region
        $region41: #{tpu_custom_call.1} parent=31 // pred_check
          %p451 = pneg %p129
        $region42: #{tpu_custom_call.1} parent=31 // pred_check_branch
          %453 = sbr.rel (%p451) target = $region44
        $region43: #{tpu_custom_call.1} parent=31 // pred_region
          %s455 = ssub.s32 512, 512
          %456 = vsyncadd %s437, %s455
          %s457 = smul.addr %s31, 4
          %s458 = sadd.s32 %s32, %s457
          %s459 = smul.addr %s458, 128
          %s460 = scalar_lea.hbm %s3, %s459
          %s461 = sshll.u32 %s440, 4
          %s462 = int_to_ptr.vmem [resolvable:$true] %s461
          %467 = dma.vmem_to_hbm [thread:$0]  %s462, 512, %s460, %s437, 128, 128, 8
        $region44: #{tpu_custom_call.1} parent=31 // pred_fallthru
          _
        // Predicated region
        $region45: #{tpu_custom_call.1} parent=31 // pred_check
          %p468 = pneg %p157
        $region46: #{tpu_custom_call.1} parent=31 // pred_check_branch
          %470 = sbr.rel (%p468) target = $region48
        $region47: #{tpu_custom_call.1} parent=31 // pred_region
          %s472 = ssub.s32 512, 512
          %473 = vsyncadd %s442, %s472
          %s474 = smul.addr %s31, 4
          %s475 = sadd.s32 %s32, %s474
          %s476 = smul.addr %s475, 128
          %s477 = scalar_lea.hbm %s4, %s476
          %s478 = sshll.u32 %s445, 4
          %s479 = int_to_ptr.vmem [resolvable:$true] %s478
          %484 = dma.vmem_to_hbm [thread:$0]  %s479, 512, %s477, %s442, 128, 128, 8
        $region48: #{tpu_custom_call.1} parent=31 // pred_fallthru
          _
        // Predicated region
        $region49: #{tpu_custom_call.1} parent=31 // pred_check
          %p485 = pneg %p185
        $region50: #{tpu_custom_call.1} parent=31 // pred_check_branch
          %487 = sbr.rel (%p485) target = $region52
        $region51: #{tpu_custom_call.1} parent=31 // pred_region
          %s489 = ssub.s32 512, 512
          %490 = vsyncadd %s447, %s489
          %s491 = smul.addr %s31, 4
          %s492 = sadd.s32 %s32, %s491
          %s493 = smul.addr %s492, 128
          %s494 = scalar_lea.hbm %s5, %s493
          %s495 = sshll.u32 %s450, 4
          %s496 = int_to_ptr.vmem [resolvable:$true] %s495
          %501 = dma.vmem_to_hbm [thread:$0]  %s496, 512, %s494, %s447, 128, 128, 8
        $region52: #{tpu_custom_call.1} parent=31 // pred_fallthru
          _
      $region32: #{tpu_custom_call.1} parent=5 // pred_fallthru
        _
      %p502 = scmp.le.s32.totalorder 2, %s22
      // Predicated region
      $region53: #{tpu_custom_call.1} parent=5 // pred_check
        %p503 = pneg %p502
      $region54: #{tpu_custom_call.1} parent=5 // pred_check_branch
        %505 = sbr.rel (%p503) target = $region56
      $region55: #{tpu_custom_call.1} parent=5 // pred_region
        %s506 = ssub.s32 %s22, 2
        // Predicated region
        $region57: #{tpu_custom_call.1} parent=55 // pred_check
          %p507 = pneg %p135
        $region58: #{tpu_custom_call.1} parent=55 // pred_check_branch
          %509 = sbr.rel (%p507) target = $region60
        $region59: #{tpu_custom_call.1} parent=55 // pred_region
          %s510 = sand.u32 %s120, 1
          %s511 = scalar_lea.sflag [#allocation4], %s510
          %s512 = sand.u32 %s120, 1
          %s513 = smul.addr %s512, 32
          %s514 = scalar_lea.vmem [#allocation7], %s513
          %515 = dma.done %s511, 512
        $region60: #{tpu_custom_call.1} parent=55 // pred_fallthru
          _
        // Predicated region
        $region61: #{tpu_custom_call.1} parent=55 // pred_check
          %p516 = pneg %p163
        $region62: #{tpu_custom_call.1} parent=55 // pred_check_branch
          %518 = sbr.rel (%p516) target = $region64
        $region63: #{tpu_custom_call.1} parent=55 // pred_region
          %s519 = sand.u32 %s28, 1
          %s520 = scalar_lea.sflag [#allocation9], %s519
          %s521 = sand.u32 %s148, 1
          %s522 = smul.addr %s521, 32
          %s523 = scalar_lea.vmem [#allocation8], %s522
          %524 = dma.done %s520, 512
        $region64: #{tpu_custom_call.1} parent=55 // pred_fallthru
          _
        // Predicated region
        $region65: #{tpu_custom_call.1} parent=55 // pred_check
          %p525 = pneg %p191
        $region66: #{tpu_custom_call.1} parent=55 // pred_check_branch
          %527 = sbr.rel (%p525) target = $region68
        $region67: #{tpu_custom_call.1} parent=55 // pred_region
          %s528 = sand.u32 %s28, 1
          %s529 = scalar_lea.sflag [#allocation9], %s528
          %s530 = sand.u32 %s176, 1
          %s531 = smul.addr %s530, 32
          %s532 = scalar_lea.vmem [#allocation10], %s531
          %533 = dma.done %s529, 512
        $region68: #{tpu_custom_call.1} parent=55 // pred_fallthru
          _
      $region56: #{tpu_custom_call.1} parent=5 // pred_fallthru
        _
    $region6: #{tpu_custom_call.1} parent=1 // loop_footer
      %s26 = sadd.s32 1, %s22
    $region7: #{tpu_custom_call.1} parent=1 // loop_footer_branch
      %21 = sbr.rel target = $region3
    $region8: #{tpu_custom_call.1} parent=1 // loop_exit
      _
    %534 = vsyncpa [#allocation3], 1
    %s535 = scalar_lea.sflag [#allocation3], 1
    %536 = vsyncpa %s535, 1
    %537 = vsyncpa [#allocation6], 1
    %538 = vsyncpa [#allocation4], 1
    %s539 = scalar_lea.sflag [#allocation4], 1
    %540 = vsyncpa %s539, 1
    %541 = vsyncpa [#allocation9], 1
    %s542 = scalar_lea.sflag [#allocation9], 1
    %543 = vsyncpa %s542, 1

// kernel: tpu_custom_call.1
$region0: #{tpu_custom_call.1}
  #allocation0 [shape = 'u32[]', space=smem, size = 0x4, offset = 0x4, fixed_abs, tag = 'smem constant byte address 0x4 - core index']
  #allocation1 [shape = 'u32[144,128]{1,0:T(1,128)}', space=vmem, size = 0x12000, scoped, tag = 'internal scratch']
  %s0 = inlined_call_operand.hbm [shape: f32[2,8,32], index: 0, kind: input, shape index: {}]
  %s1 = inlined_call_operand.hbm [shape: f32[32,96], index: 1, kind: input, shape index: {}]
  %s2 = inlined_call_operand.vmem [shape: f32[1,96], index: 2, kind: input, shape index: {}]
  %s3 = inlined_call_operand.hbm [shape: f32[2,4,8,8], index: 3, kind: output, shape index: {0}]
  %s4 = inlined_call_operand.hbm [shape: f32[2,4,8,8], index: 4, kind: output, shape index: {1}]
  %s5 = inlined_call_operand.hbm [shape: f32[2,4,8,8], index: 5, kind: output, shape index: {2}]
  %6 = xla_tuple %s3, %s4, %s5
  %s7 = sld [smem:[#allocation0]]
  $region69: #{tpu_custom_call.1} parent=0
    _
  %s9 = ssub.s32 1, %s7
  %s10 = scalar_select 0, %s9, %s7
  $region1: #{tpu_custom_call.1} parent=0
    #allocation2 [shape = 'u8[8192]{0}', space=vmem, size = 0x2000, scoped, tag = 'input window, operand 0']
    #allocation3 [shape = 's32[2]{0}', space=sflag, size = 0x8, scoped, tag = 'scoped memory for tpu_custom_call.1']
    #allocation4 [shape = 's32[2]{0}', space=sflag, size = 0x8, scoped, tag = 'scoped memory for tpu_custom_call.1']
    #allocation5 [shape = 'u8[16384]{0}', space=vmem, size = 0x4000, scoped, tag = 'input window, operand 1, single buffered']
    #allocation6 [shape = 's32[1]{0}', space=sflag, size = 0x4, scoped, tag = 'scoped memory for tpu_custom_call.1']
    #allocation7 [shape = 'u8[32768]{0}', space=vmem, size = 0x8000, scoped, tag = 'output window, operand 0']
    #allocation8 [shape = 'u8[32768]{0}', space=vmem, size = 0x8000, scoped, tag = 'output window, operand 1']
    #allocation9 [shape = 's32[2]{0}', space=sflag, size = 0x8, scoped, tag = 'scoped memory for tpu_custom_call.1']
    #allocation10 [shape = 'u8[32768]{0}', space=vmem, size = 0x8000, scoped, tag = 'output window, operand 2']
    %11 = vsyncpa [#allocation3], 0
    %s12 = scalar_lea.sflag [#allocation3], 1
    %13 = vsyncpa %s12, 0
    %14 = vsyncpa [#allocation6], 0
    %15 = vsyncpa [#allocation4], 0
    %s16 = scalar_lea.sflag [#allocation4], 1
    %17 = vsyncpa %s16, 0
    %18 = vsyncpa [#allocation9], 0
    %s19 = scalar_lea.sflag [#allocation9], 1
    %20 = vsyncpa %s19, 0
    loop: start=0, step=1, limit=4
    $region2: #{tpu_custom_call.1} parent=1 // loop_pre_header
      _
    $region3: #{tpu_custom_call.1} parent=1 // loop_header
      %s22 = sphi 0, %s26
      %p23 = scmp.ge.s32.totalorder %s22, 4
      %s29 = sphi 0, %s41
      %s30 = sphi 0, %s37
      %s31 = sphi 0, %s29
      %s32 = sphi 0, %s30
      %s33 = sphi 0, %s31
      %s34 = sphi 0, %s32
      %s46 = sphi 0, %s48
      %s49 = sphi 0, %s46
      %s50 = sphi 0, %s49
      %s66 = sphi 0, %s50
      %s70 = sphi 0, %s70
      %s72 = sphi 0, %s70
      %s73 = sphi 0, %s72
      %s87 = sphi 0, %s73
      %s91 = sphi 0, %s91
      %s93 = sphi 0, %s91
      %s94 = sphi 0, %s93
      %s108 = sphi 0, %s94
      %s116 = sphi 0, %s118
      %s119 = sphi 0, %s116
      %s120 = sphi 0, %s119
      %s136 = sphi 0, %s120
      %s144 = sphi 0, %s146
      %s147 = sphi 0, %s144
      %s148 = sphi 0, %s147
      %s164 = sphi 0, %s148
      %s172 = sphi 0, %s174
      %s175 = sphi 0, %s172
      %s176 = sphi 0, %s175
      %s192 = sphi 0, %s176
    $region4: #{tpu_custom_call.1} parent=1 // loop_header_branch
      %25 = sbr.rel (%p23) target = $region8
    $region5: #{tpu_custom_call.1} parent=1 // loop_body
      %s27 = ssub.s32 %s22, 1
      %s28 = ssub.s32 %s22, 2
      %s35 = sadd.s32 1, %s30
      %p36 = scmp.ge.s32.totalorder %s35, 1
      %s37 = scalar_select %p36, 0, %s35
      %s38 = sadd.s32 1, %s29
      %s39 = scalar_select %p36, %s38, %s29
      %p40 = scmp.ge.s32.totalorder %s39, 2
      %s41 = scalar_select %p40, 0, %s39
      %s42 = ssub.s32 %s29, %s41
      %s43 = ssub.s32 %s30, %s37
      %s44 = sor.u32 %s42, %s43
      %p45 = scmp.eq.s32.totalorder %s44, 0
      %s47 = sadd.s32 %s46, 1
      %s48 = scalar_select %p45, %s46, %s47
      %p51 = pneg %p45
      %p52 = scmp.eq.s32.totalorder %s22, 1
      %p53 = por %p51, %p52
      %p54 = scmp.ne.s32.totalorder %s46, %s49
      %p55 = scmp.eq.s32.totalorder %s22, 0
      %p56 = por %p54, %p55
      %p57 = scmp.ne.s32.totalorder %s46, %s49
      %p58 = scmp.eq.s32.totalorder %s27, 1
      %p59 = por %p57, %p58
      %p60 = scmp.ne.s32.totalorder %s49, %s50
      %p61 = scmp.eq.s32.totalorder %s27, 0
      %p62 = por %p60, %p61
      %p63 = scmp.ne.s32.totalorder %s49, %s50
      %p64 = scmp.eq.s32.totalorder %s28, 1
      %p65 = por %p63, %p64
      %p67 = scmp.ne.s32.totalorder %s50, %s66
      %p68 = scmp.eq.s32.totalorder %s28, 0
      %p69 = por %p67, %p68
      %s71 = sadd.s32 %s70, 1
      %p74 = scmp.eq.s32.totalorder %s22, 1
      %p75 = scmp.ne.s32.totalorder %s70, %s72
      %p76 = scmp.eq.s32.totalorder %s22, 0
      %p77 = por %p75, %p76
      %p78 = scmp.ne.s32.totalorder %s70, %s72
      %p79 = scmp.eq.s32.totalorder %s27, 1
      %p80 = por %p78, %p79
      %p81 = scmp.ne.s32.totalorder %s72, %s73
      %p82 = scmp.eq.s32.totalorder %s27, 0
      %p83 = por %p81, %p82
      %p84 = scmp.ne.s32.totalorder %s72, %s73
      %p85 = scmp.eq.s32.totalorder %s28, 1
      %p86 = por %p84, %p85
      %p88 = scmp.ne.s32.totalorder %s73, %s87
      %p89 = scmp.eq.s32.totalorder %s28, 0
      %p90 = por %p88, %p89
      %s92 = sadd.s32 %s91, 1
      %p95 = scmp.eq.s32.totalorder %s22, 1
      %p96 = scmp.ne.s32.totalorder %s91, %s93
      %p97 = scmp.eq.s32.totalorder %s22, 0
      %p98 = por %p96, %p97
      %p99 = scmp.ne.s32.totalorder %s91, %s93
      %p100 = scmp.eq.s32.totalorder %s27, 1
      %p101 = por %p99, %p100
      %p102 = scmp.ne.s32.totalorder %s93, %s94
      %p103 = scmp.eq.s32.totalorder %s27, 0
      %p104 = por %p102, %p103
      %p105 = scmp.ne.s32.totalorder %s93, %s94
      %p106 = scmp.eq.s32.totalorder %s28, 1
      %p107 = por %p105, %p106
      %p109 = scmp.ne.s32.totalorder %s94, %s108
      %p110 = scmp.eq.s32.totalorder %s28, 0
      %p111 = por %p109, %p110
      %s112 = ssub.s32 %s29, %s41
      %s113 = ssub.s32 %s30, %s37
      %s114 = sor.u32 %s112, %s113
      %p115 = scmp.eq.s32.totalorder %s114, 0
      %s117 = sadd.s32 %s116, 1
      %s118 = scalar_select %p115, %s116, %s117
      %p121 = pneg %p115
      %p122 = scmp.eq.s32.totalorder %s22, 1
      %p123 = por %p121, %p122
      %p124 = scmp.ne.s32.totalorder %s116, %s119
      %p125 = scmp.eq.s32.totalorder %s22, 0
      %p126 = por %p124, %p125
      %p127 = scmp.ne.s32.totalorder %s116, %s119
      %p128 = scmp.eq.s32.totalorder %s27, 1
      %p129 = por %p127, %p128
      %p130 = scmp.ne.s32.totalorder %s119, %s120
      %p131 = scmp.eq.s32.totalorder %s27, 0
      %p132 = por %p130, %p131
      %p133 = scmp.ne.s32.totalorder %s119, %s120
      %p134 = scmp.eq.s32.totalorder %s28, 1
      %p135 = por %p133, %p134
      %p137 = scmp.ne.s32.totalorder %s120, %s136
      %p138 = scmp.eq.s32.totalorder %s28, 0
      %p139 = por %p137, %p138
      %s140 = ssub.s32 %s29, %s41
      %s141 = ssub.s32 %s30, %s37
      %s142 = sor.u32 %s140, %s141
      %p143 = scmp.eq.s32.totalorder %s142, 0
      %s145 = sadd.s32 %s144, 1
      %s146 = scalar_select %p143, %s144, %s145
      %p149 = pneg %p143
      %p150 = scmp.eq.s32.totalorder %s22, 1
      %p151 = por %p149, %p150
      %p152 = scmp.ne.s32.totalorder %s144, %s147
      %p153 = scmp.eq.s32.totalorder %s22, 0
      %p154 = por %p152, %p153
      %p155 = scmp.ne.s32.totalorder %s144, %s147
      %p156 = scmp.eq.s32.totalorder %s27, 1
      %p157 = por %p155, %p156
      %p158 = scmp.ne.s32.totalorder %s147, %s148
      %p159 = scmp.eq.s32.totalorder %s27, 0
      %p160 = por %p158, %p159
      %p161 = scmp.ne.s32.totalorder %s147, %s148
      %p162 = scmp.eq.s32.totalorder %s28, 1
      %p163 = por %p161, %p162
      %p165 = scmp.ne.s32.totalorder %s148, %s164
      %p166 = scmp.eq.s32.totalorder %s28, 0
      %p167 = por %p165, %p166
      %s168 = ssub.s32 %s29, %s41
      %s169 = ssub.s32 %s30, %s37
      %s170 = sor.u32 %s168, %s169
      %p171 = scmp.eq.s32.totalorder %s170, 0
      %s173 = sadd.s32 %s172, 1
      %s174 = scalar_select %p171, %s172, %s173
      %p177 = pneg %p171
      %p178 = scmp.eq.s32.totalorder %s22, 1
      %p179 = por %p177, %p178
      %p180 = scmp.ne.s32.totalorder %s172, %s175
      %p181 = scmp.eq.s32.totalorder %s22, 0
      %p182 = por %p180, %p181
      %p183 = scmp.ne.s32.totalorder %s172, %s175
      %p184 = scmp.eq.s32.totalorder %s27, 1
      %p185 = por %p183, %p184
      %p186 = scmp.ne.s32.totalorder %s175, %s176
      %p187 = scmp.eq.s32.totalorder %s27, 0
      %p188 = por %p186, %p187
      %p189 = scmp.ne.s32.totalorder %s175, %s176
      %p190 = scmp.eq.s32.totalorder %s28, 1
      %p191 = por %p189, %p190
      %p193 = scmp.ne.s32.totalorder %s176, %s192
      %p194 = scmp.eq.s32.totalorder %s28, 0
      %p195 = por %p193, %p194
      %p196 = scmp.le.s32.totalorder 1, %s22
      %p197 = scmp.lt.s32.totalorder %s22, 3
      %p198 = pnand %p196, %p197
      %p199 = pneg %p198
      // Predicated region
      $region9: #{tpu_custom_call.1} parent=5 // pred_check
        _
      $region10: #{tpu_custom_call.1} parent=5 // pred_check_branch
        %201 = sbr.rel (%p198) target = $region12
      $region11: #{tpu_custom_call.1} parent=5 // pred_region
        %s202 = ssub.s32 %s22, 1
        // Predicated region
        $region13: #{tpu_custom_call.1} parent=11 // pred_check
          %p203 = pneg %p83
        $region14: #{tpu_custom_call.1} parent=11 // pred_check_branch
          %205 = sbr.rel (%p203) target = $region16
        $region15: #{tpu_custom_call.1} parent=11 // pred_region
          %s207 = ssub.s32 512, 512
          %208 = vsyncadd [#allocation6], %s207
          %s209 = sshll.u32 [#allocation5], 4
          %s210 = int_to_ptr.vmem [resolvable:$true] %s209
          %215 = dma.hbm_to_vmem [thread:$0]  %s1, 512, %s210, [#allocation6], 128, 128, 8
        $region16: #{tpu_custom_call.1} parent=11 // pred_fallthru
          _
        // Predicated region
        $region17: #{tpu_custom_call.1} parent=11 // pred_check
          %p216 = pneg %p104
        $region18: #{tpu_custom_call.1} parent=11 // pred_check_branch
          %218 = sbr.rel (%p216) target = $region20
        $region19: #{tpu_custom_call.1} parent=11 // pred_region
          _
        $region20: #{tpu_custom_call.1} parent=11 // pred_fallthru
          _
      $region12: #{tpu_custom_call.1} parent=5 // pred_fallthru
        _
      %p219 = scmp.lt.s32.totalorder %s22, 2
      // Predicated region
      $region21: #{tpu_custom_call.1} parent=5 // pred_check
        %p220 = pneg %p219
      $region22: #{tpu_custom_call.1} parent=5 // pred_check_branch
        %222 = sbr.rel (%p220) target = $region24
      $region23: #{tpu_custom_call.1} parent=5 // pred_region
        // Predicated region
        $region25: #{tpu_custom_call.1} parent=23 // pred_check
          %p223 = pneg %p56
        $region26: #{tpu_custom_call.1} parent=23 // pred_check_branch
          %225 = sbr.rel (%p223) target = $region28
        $region27: #{tpu_custom_call.1} parent=23 // pred_region
          %s226 = sand.u32 %s46, 1
          %s227 = scalar_lea.sflag [#allocation3], %s226
          %s228 = sand.u32 %s46, 1
          %s229 = smul.addr %s228, 8
          %s230 = scalar_lea.vmem [#allocation2], %s229
          %s232 = ssub.s32 128, 128
          %233 = vsyncadd %s227, %s232
          %s234 = sadd.s32 %s30, %s29
          %s235 = smul.addr %s234, 128
          %s236 = scalar_lea.hbm %s0, %s235
          %s238 = sshll.u32 %s230, 4
          %s239 = int_to_ptr.vmem [resolvable:$true] %s238
          %241 = dma.hbm_to_vmem [thread:$0]  %s236, 128, %s239, %s227
        $region28: #{tpu_custom_call.1} parent=23 // pred_fallthru
          _
      $region24: #{tpu_custom_call.1} parent=5 // pred_fallthru
        _
      %p242 = scmp.le.s32.totalorder 1, %s22
      %p243 = scmp.lt.s32.totalorder %s22, 3
      %p244 = pnand %p242, %p243
      %p245 = pneg %p244
      // Predicated region
      $region29: #{tpu_custom_call.1} parent=5 // pred_check
        _
      $region30: #{tpu_custom_call.1} parent=5 // pred_check_branch
        %247 = sbr.rel (%p244) target = $region32
      $region31: #{tpu_custom_call.1} parent=5 // pred_region
        %s248 = ssub.s32 %s22, 1
        %s249 = sand.u32 %s49, 1
        %s250 = scalar_lea.sflag [#allocation3], %s249
        %s251 = sand.u32 %s49, 1
        %s252 = smul.addr %s251, 8
        %s253 = scalar_lea.vmem [#allocation2], %s252
        // Predicated region
        $region33: #{tpu_custom_call.1} parent=31 // pred_check
          %p254 = pneg %p62
        $region34: #{tpu_custom_call.1} parent=31 // pred_check_branch
          %256 = sbr.rel (%p254) target = $region36
        $region35: #{tpu_custom_call.1} parent=31 // pred_region
          %257 = dma.done %s250, 128
        $region36: #{tpu_custom_call.1} parent=31 // pred_fallthru
          _
        // Predicated region
        $region37: #{tpu_custom_call.1} parent=31 // pred_check
          %p258 = pneg %p83
        $region38: #{tpu_custom_call.1} parent=31 // pred_check_branch
          %260 = sbr.rel (%p258) target = $region40
        $region39: #{tpu_custom_call.1} parent=31 // pred_region
          %261 = dma.done [#allocation6], 512
        $region40: #{tpu_custom_call.1} parent=31 // pred_fallthru
          _
        %s262 = sand.u32 %s49, 1
        %s263 = scalar_lea.sflag [#allocation3], %s262
        %s264 = sand.u32 %s49, 1
        %s265 = smul.addr %s264, 8
        %s266 = scalar_lea.vmem [#allocation2], %s265
        %p267 = pneg %p62
        %p268 = pneg %p59
        %p269 = pneg %p83
        %p270 = pneg %p80
        %p271 = pneg %p104
        %p272 = pneg %p101
        %p273 = pneg %p132
        %p274 = pneg %p129
        %s275 = sand.u32 %s119, 1
        %s276 = scalar_lea.sflag [#allocation4], %s275
        %s277 = sand.u32 %s119, 1
        %s278 = smul.addr %s277, 32
        %s279 = scalar_lea.vmem [#allocation7], %s278
        %p280 = pneg %p160
        %p281 = pneg %p157
        %s282 = sand.u32 %s27, 1
        %s283 = scalar_lea.sflag [#allocation9], %s282
        %s284 = sand.u32 %s147, 1
        %s285 = smul.addr %s284, 32
        %s286 = scalar_lea.vmem [#allocation8], %s285
        %p287 = pneg %p188
        %p288 = pneg %p185
        %s289 = sand.u32 %s27, 1
        %s290 = scalar_lea.sflag [#allocation9], %s289
        %s291 = sand.u32 %s175, 1
        %s292 = smul.addr %s291, 32
        %s293 = scalar_lea.vmem [#allocation10], %s292
        %v294 = vld [vmem:[%s253] sm:$0xff]
        %v295 = vld [vmem:[#allocation5] sm:$0xff]
        %v296 = vld [vmem:[#allocation5 + $0x8] sm:$0xff]
        %v297 = vld [vmem:[#allocation5 + $0x10] sm:$0xff]
        %v298 = vld [vmem:[#allocation5 + $0x18] sm:$0xff]
        %v299 = vld [vmem:[%s2] sm:$0x1]
        %v301 = vlaneseq
        %v302 = vshrl.u32 %v301, 7
        %v303 = vsub.s32 0, %v302
        %v304 = vrot.slane %v299, %v303
        %vm306 = vcmask 261120
        %v308 = vsel %vm306, %v294, 0
        %310 = vmatprep.subr.mxu0 0.0
        %311 = vmatpush1.msra.mxu0 %v295
        %312 = vmatprep.subr.mxu0 0.0
        %313 = vmatpush1.msra.mxu0 %v296
        %314 = vmatprep.subr.mxu0 0.0
        %315 = vmatpush1.msra.mxu0 %v297
        %316 = vmatprep.subr.mxu0 0.0
        %317 = vmatpush1.msra.mxu0 %v298
        %318 = vmatprep.subr.mxu0 0.0
        %319 = vmatpush1.msra.mxu0 0.0
        %320 = vmatprep.subr.mxu0 0.0
        %321 = vmatpush1.msra.mxu0 0.0
        %322 = vmatprep.subr.mxu0 0.0
        %323 = vmatpush1.msra.mxu0 0.0
        %324 = vmatprep.subr.mxu0 0.0
        %325 = vmatpush1.msra.mxu0 0.0
        %326 = vmatprep.subr.mxu0 0.0
        %327 = vmatpush1.msra.mxu0 0.0
        %328 = vmatprep.subr.mxu0 0.0
        %329 = vmatpush1.msra.mxu0 0.0
        %330 = vmatprep.subr.mxu0 0.0
        %331 = vmatpush1.msra.mxu0 0.0
        %332 = vmatprep.subr.mxu0 0.0
        %333 = vmatpush1.msra.mxu0 0.0
        %334 = vmatprep.subr.mxu0 0.0
        %335 = vmatpush1.msra.mxu0 0.0
        %336 = vmatprep.subr.mxu0 0.0
        %337 = vmatpush1.msra.mxu0 0.0
        %338 = vmatprep.subr.mxu0 0.0
        %339 = vmatpush1.msra.mxu0 0.0
        %340 = vmatprep.subr.mxu0 0.0
        %341 = vmatpush1.msra.mxu0 0.0
        %342 = vmatprep.subr.mxu0 0.0
        %343 = vmatpush1.msra.mxu0 0.0
        %344 = vmatprep.subr.mxu0 0.0
        %345 = vmatpush1.msra.mxu0 0.0
        %346 = vmatprep.subr.mxu0 0.0
        %347 = vmatpush1.msra.mxu0 0.0
        %348 = vmatprep.subr.mxu0 0.0
        %349 = vmatpush1.msra.mxu0 0.0
        %350 = vmatprep.subr.mxu0 0.0
        %351 = vmatpush1.msra.mxu0 0.0
        %352 = vmatprep.subr.mxu0 0.0
        %353 = vmatpush1.msra.mxu0 0.0
        %354 = vmatprep.subr.mxu0 0.0
        %355 = vmatpush1.msra.mxu0 0.0
        %356 = vmatprep.subr.mxu0 0.0
        %357 = vmatpush1.msra.mxu0 0.0
        %358 = vmatprep.subr.mxu0 0.0
        %359 = vmatpush1.msra.mxu0 0.0
        %360 = vmatprep.subr.mxu0 0.0
        %361 = vmatpush1.msra.mxu0 0.0
        %362 = vmatprep.subr.mxu0 0.0
        %363 = vmatpush1.msra.mxu0 0.0
        %364 = vmatprep.subr.mxu0 0.0
        %365 = vmatpush1.msra.mxu0 0.0
        %366 = vmatprep.subr.mxu0 0.0
        %367 = vmatpush1.msra.mxu0 0.0
        %368 = vmatprep.subr.mxu0 0.0
        %369 = vmatpush1.msra.mxu0 0.0
        %370 = vmatprep.subr.mxu0 0.0
        %371 = vmatpush1.msra.mxu0 0.0
        %372 = vmatprep.subr.mxu0 0.0
        %373 = vmatpush1.msra.mxu0 0.0
        %374 = vmatprep.mubr.f32.mxu0 0.0
        %375 = vmatmul.mubr.f32.gmra.mrb[0].mxu0 %v308
        %v376 = vpop.f32.mrb[0].mxu0
        %v377 = vadd.f32 %v304, %v376
        %v378 = vpop.f32.mrb[0].mxu0
        %379 = vdwg.mxu0
        %vm380 = vcmask 64512
        %381 = vst.msk [vmem:[%s279] sm:$0xff] %vm380, %v377
        %383 = vrot.lane.b32.xlu0 %v377, 96
        %v384 = vpop.permute.xlu0 %383
        %386 = vst.msk [vmem:[%s286] sm:$0xff] %vm380, %v384
        %387 = vrot.lane.b32.xlu0 %v377, 64
        %v388 = vpop.permute.xlu0 %387
        %390 = vst.msk [vmem:[%s293] sm:$0xff] %vm380, %v388
        %391 = vrot.lane.b32.xlu0 %v377, 120
        %v392 = vpop.permute.xlu0 %391
        %s394 = scalar_lea.vmem %s279, 8 [#allocation7]
        %395 = vst.msk [vmem:[%s394] sm:$0xff] %vm380, %v392
        %396 = vrot.lane.b32.xlu0 %v377, 88
        %v397 = vpop.permute.xlu0 %396
        %s399 = scalar_lea.vmem %s286, 8 [#allocation8]
        %400 = vst.msk [vmem:[%s399] sm:$0xff] %vm380, %v397
        %401 = vrot.lane.b32.xlu0 %v377, 56
        %v402 = vpop.permute.xlu0 %401
        %s404 = scalar_lea.vmem %s293, 8 [#allocation10]
        %405 = vst.msk [vmem:[%s404] sm:$0xff] %vm380, %v402
        %406 = vrot.lane.b32.xlu0 %v377, 112
        %v407 = vpop.permute.xlu0 %406
        %s409 = scalar_lea.vmem %s279, 16 [#allocation7]
        %410 = vst.msk [vmem:[%s409] sm:$0xff] %vm380, %v407
        %411 = vrot.lane.b32.xlu0 %v377, 80
        %v412 = vpop.permute.xlu0 %411
        %s414 = scalar_lea.vmem %s286, 16 [#allocation8]
        %415 = vst.msk [vmem:[%s414] sm:$0xff] %vm380, %v412
        %416 = vrot.lane.b32.xlu0 %v377, 48
        %v417 = vpop.permute.xlu0 %416
        %s419 = scalar_lea.vmem %s293, 16 [#allocation10]
        %420 = vst.msk [vmem:[%s419] sm:$0xff] %vm380, %v417
        %421 = vrot.lane.b32.xlu0 %v377, 104
        %v422 = vpop.permute.xlu0 %421
        %s424 = scalar_lea.vmem %s279, 24 [#allocation7]
        %425 = vst.msk [vmem:[%s424] sm:$0xff] %vm380, %v422
        %426 = vrot.lane.b32.xlu0 %v377, 72
        %v427 = vpop.permute.xlu0 %426
        %s429 = scalar_lea.vmem %s286, 24 [#allocation8]
        %430 = vst.msk [vmem:[%s429] sm:$0xff] %vm380, %v427
        %431 = vrot.lane.b32.xlu0 %v377, 40
        %v432 = vpop.permute.xlu0 %431
        %s434 = scalar_lea.vmem %s293, 24 [#allocation10]
        %435 = vst.msk [vmem:[%s434] sm:$0xff] %vm380, %v432
        %s436 = sand.u32 %s119, 1
        %s437 = scalar_lea.sflag [#allocation4], %s436
        %s438 = sand.u32 %s119, 1
        %s439 = smul.addr %s438, 32
        %s440 = scalar_lea.vmem [#allocation7], %s439
        %s441 = sand.u32 %s27, 1
        %s442 = scalar_lea.sflag [#allocation9], %s441
        %s443 = sand.u32 %s147, 1
        %s444 = smul.addr %s443, 32
        %s445 = scalar_lea.vmem [#allocation8], %s444
        %s446 = sand.u32 %s27, 1
        %s447 = scalar_lea.sflag [#allocation9], %s446
        %s448 = sand.u32 %s175, 1
        %s449 = smul.addr %s448, 32
        %s450 = scalar_lea.vmem [#allocation10], %s449
        // Predicated region
        $region41: #{tpu_custom_call.1} parent=31 // pred_check
          %p451 = pneg %p129
        $region42: #{tpu_custom_call.1} parent=31 // pred_check_branch
          %453 = sbr.rel (%p451) target = $region44
        $region43: #{tpu_custom_call.1} parent=31 // pred_region
          %s455 = ssub.s32 512, 512
          %456 = vsyncadd %s437, %s455
          %s457 = smul.addr %s31, 4
          %s458 = sadd.s32 %s32, %s457
          %s459 = smul.addr %s458, 128
          %s460 = scalar_lea.hbm %s3, %s459
          %s461 = sshll.u32 %s440, 4
          %s462 = int_to_ptr.vmem [resolvable:$true] %s461
          %467 = dma.vmem_to_hbm [thread:$0]  %s462, 512, %s460, %s437, 128, 128, 8
        $region44: #{tpu_custom_call.1} parent=31 // pred_fallthru
          _
        // Predicated region
        $region45: #{tpu_custom_call.1} parent=31 // pred_check
          %p468 = pneg %p157
        $region46: #{tpu_custom_call.1} parent=31 // pred_check_branch
          %470 = sbr.rel (%p468) target = $region48
        $region47: #{tpu_custom_call.1} parent=31 // pred_region
          %s472 = ssub.s32 512, 512
          %473 = vsyncadd %s442, %s472
          %s474 = smul.addr %s31, 4
          %s475 = sadd.s32 %s32, %s474
          %s476 = smul.addr %s475, 128
          %s477 = scalar_lea.hbm %s4, %s476
          %s478 = sshll.u32 %s445, 4
          %s479 = int_to_ptr.vmem [resolvable:$true] %s478
          %484 = dma.vmem_to_hbm [thread:$0]  %s479, 512, %s477, %s442, 128, 128, 8
        $region48: #{tpu_custom_call.1} parent=31 // pred_fallthru
          _
        // Predicated region
        $region49: #{tpu_custom_call.1} parent=31 // pred_check
          %p485 = pneg %p185
        $region50: #{tpu_custom_call.1} parent=31 // pred_check_branch
          %487 = sbr.rel (%p485) target = $region52
        $region51: #{tpu_custom_call.1} parent=31 // pred_region
          %s489 = ssub.s32 512, 512
          %490 = vsyncadd %s447, %s489
          %s491 = smul.addr %s31, 4
          %s492 = sadd.s32 %s32, %s491
          %s493 = smul.addr %s492, 128
          %s494 = scalar_lea.hbm %s5, %s493
          %s495 = sshll.u32 %s450, 4
          %s496 = int_to_ptr.vmem [resolvable:$true] %s495
          %501 = dma.vmem_to_hbm [thread:$0]  %s496, 512, %s494, %s447, 128, 128, 8
        $region52: #{tpu_custom_call.1} parent=31 // pred_fallthru
          _
      $region32: #{tpu_custom_call.1} parent=5 // pred_fallthru
        _
      %p502 = scmp.le.s32.totalorder 2, %s22
      // Predicated region
      $region53: #{tpu_custom_call.1} parent=5 // pred_check
        %p503 = pneg %p502
      $region54: #{tpu_custom_call.1} parent=5 // pred_check_branch
        %505 = sbr.rel (%p503) target = $region56
      $region55: #{tpu_custom_call.1} parent=5 // pred_region
        %s506 = ssub.s32 %s22, 2
        // Predicated region
        $region57: #{tpu_custom_call.1} parent=55 // pred_check
          %p507 = pneg %p135
        $region58: #{tpu_custom_call.1} parent=55 // pred_check_branch
          %509 = sbr.rel (%p507) target = $region60
        $region59: #{tpu_custom_call.1} parent=55 // pred_region
          %s510 = sand.u32 %s120, 1
          %s511 = scalar_lea.sflag [#allocation4], %s510
          %s512 = sand.u32 %s120, 1
          %s513 = smul.addr %s512, 32
          %s514 = scalar_lea.vmem [#allocation7], %s513
          %515 = dma.done %s511, 512
        $region60: #{tpu_custom_call.1} parent=55 // pred_fallthru
          _
        // Predicated region
        $region61: #{tpu_custom_call.1} parent=55 // pred_check
          %p516 = pneg %p163
        $region62: #{tpu_custom_call.1} parent=55 // pred_check_branch
          %518 = sbr.rel (%p516) target = $region64
        $region63: #{tpu_custom_call.1} parent=55 // pred_region
          %s519 = sand.u32 %s28, 1
          %s520 = scalar_lea.sflag [#allocation9], %s519
          %s521 = sand.u32 %s148, 1
          %s522 = smul.addr %s521, 32
          %s523 = scalar_lea.vmem [#allocation8], %s522
          %524 = dma.done %s520, 512
        $region64: #{tpu_custom_call.1} parent=55 // pred_fallthru
          _
        // Predicated region
        $region65: #{tpu_custom_call.1} parent=55 // pred_check
          %p525 = pneg %p191
        $region66: #{tpu_custom_call.1} parent=55 // pred_check_branch
          %527 = sbr.rel (%p525) target = $region68
        $region67: #{tpu_custom_call.1} parent=55 // pred_region
          %s528 = sand.u32 %s28, 1
          %s529 = scalar_lea.sflag [#allocation9], %s528
          %s530 = sand.u32 %s176, 1
          %s531 = smul.addr %s530, 32
          %s532 = scalar_lea.vmem [#allocation10], %s531
          %533 = dma.done %s529, 512
        $region68: #{tpu_custom_call.1} parent=55 // pred_fallthru
          _
      $region56: #{tpu_custom_call.1} parent=5 // pred_fallthru
        _
    $region6: #{tpu_custom_call.1} parent=1 // loop_footer
      %s26 = sadd.s32 1, %s22
    $region7: #{tpu_custom_call.1} parent=1 // loop_footer_branch
      %21 = sbr.rel target = $region3
    $region8: #{tpu_custom_call.1} parent=1 // loop_exit
      _
    %534 = vsyncpa [#allocation3], 1
    %s535 = scalar_lea.sflag [#allocation3], 1
    %536 = vsyncpa %s535, 1
    %537 = vsyncpa [#allocation6], 1
    %538 = vsyncpa [#allocation4], 1
    %s539 = scalar_lea.sflag [#allocation4], 1
    %540 = vsyncpa %s539, 1
    %541 = vsyncpa [#allocation9], 1
    %s542 = scalar_lea.sflag [#allocation9], 1
    %543 = vsyncpa %s542, 1

</llo_original>
